<compile_context>
chip_gen: v6e
topology: v6e:2x2x1
jax: 0.10.0
libtpu: 0.0.40
codegen_flags: <defaults>
</compile_context>

<pallas_src>
import math

import jax
import jax.numpy as jnp
from jax.experimental import pallas as pl
from jax.experimental.pallas import tpu as pltpu


def _vmem_capacity_bytes(default=64 * 1024 * 1024):
    """Physical VMEM capacity; conservative 64 MiB fallback (safe on v7x)."""
    try:
        info = pltpu.get_tpu_info()
        cap = getattr(info, "vmem_capacity_bytes", None)
        if cap:
            return int(cap)
    except Exception:
        pass
    return default


def _round_up(n, m):
    return ((n + m - 1) // m) * m


def _affine_kernel(x_ref, wt_ref, b_ref, o_ref):
    """o = x @ W_T + b for one (batch-tile, output-column-tile).

    x_ref : (tm, D)  flattened input tile (compute dtype, e.g. bf16)
    wt_ref: (D, tn)  column block of the PRE-TRANSPOSED weight (compute dtype)
    b_ref : (1, tn)  f32 bias slice for this output tile
    o_ref : (tm, tn) f32 output tile
    """
    acc = jnp.dot(x_ref[...], wt_ref[...], preferred_element_type=jnp.float32)
    o_ref[...] = (acc + b_ref[...]).astype(o_ref.dtype)


def affine_denoise_flat(x_flat, weight_t, bias, *, out_dtype=jnp.float32):
    """x_flat: (B, D), weight_t: (D, D) = A.T (pre-transposed), bias: (D,).

    Returns (B, D) = x_flat @ weight_t + bias in out_dtype.
    """
    B, D = x_flat.shape
    assert weight_t.shape == (D, D)
    bias2d = bias.reshape(1, D).astype(jnp.float32)

    w_bytes = jnp.dtype(weight_t.dtype).itemsize
    x_bytes = jnp.dtype(x_flat.dtype).itemsize
    o_bytes = jnp.dtype(out_dtype).itemsize

    # --- generation-aware budgets -------------------------------------------
    vmem_cap = _vmem_capacity_bytes()                  # 128 MiB v5e/v6e, 64 MiB v7x
    weight_budget = int(0.65 * vmem_cap)               # double-buffered weight stream

    # --- batch (M) tiling -----------------------------------------------------
    # Small B: whole batch resident.  Large B: MXU-native 256-row tiles.
    tm = B if B <= 256 else 256
    grid_m = pl.cdiv(B, tm)

    # --- output (N) tiling ----------------------------------------------------
    # Largest 128-aligned column block of W_T whose double-buffered stream fits
    # the weight budget; whole weight in one block when it fits.
    cap_cols = weight_budget // (2 * D * w_bytes)
    tn_cap = max(128, (cap_cols // 128) * 128)
    tn = D if D <= tn_cap else tn_cap
    # Force >= 2 output tiles so the parallel grid axis can split the weight
    # DMA across both TensorCores on v7x (harmless single extra step elsewhere).
    if tn >= D and D >= 256:
        tn = _round_up(pl.cdiv(D, 2), 128)
    grid_n = pl.cdiv(D, tn)

    # --- VMEM limit derived from the actual buffer sizes ---------------------
    vmem_needed = (
        2 * D * tn * w_bytes          # weight double buffer
        + 2 * tm * D * x_bytes        # x double buffer
        + 2 * tm * tn * o_bytes       # output double buffer
        + 2 * tn * 4                  # bias double buffer
        + (2 << 20)                   # compiler slack
    )
    vmem_limit = int(min(max(vmem_needed, 32 << 20), vmem_cap - (8 << 20)))
    # TODO(synk): for D so large that even tn=128 overflows VMEM, add a K grid
    # axis ("arbitrary") with an f32 accumulator scratch instead.

    return pl.pallas_call(
        _affine_kernel,
        out_shape=jax.ShapeDtypeStruct((B, D), out_dtype),
        grid_spec=pltpu.PrefetchScalarGridSpec(
            num_scalar_prefetch=0,
            grid=(grid_m, grid_n),
            in_specs=[
                pl.BlockSpec((tm, D), lambda i, j: (i, 0)),    # x tile (resident over j)
                pl.BlockSpec((D, tn), lambda i, j: (0, j)),    # W_T column block
                pl.BlockSpec((1, tn), lambda i, j: (0, j)),    # bias slice
            ],
            out_specs=pl.BlockSpec((tm, tn), lambda i, j: (i, j)),
        ),
        compiler_params=pltpu.CompilerParams(
            # Both axes are independent output tiles -> megacore sharding on v7x.
            dimension_semantics=("parallel", "parallel"),
            vmem_limit_bytes=vmem_limit,
        ),
    )(x_flat, weight_t, bias2d)


class OptimalAffineDenoiserJAX:
    """JAX/Pallas port of OptimalAffineDenoiser (forward only)."""

    def __init__(self, dataset: jnp.ndarray, noise_std: float,
                 compute_dtype=jnp.bfloat16):
        # dataset: (N, C, H, W).  The affine map is precomputed in plain JAX
        # (one-time setup, not part of the forward hot path).
        self.input_shape = dataset.shape[1:]
        d = math.prod(self.input_shape)
        flat = dataset.reshape(dataset.shape[0], d).astype(jnp.float32)
        self.noise_variance = noise_std ** 2

        self.mean = jnp.mean(flat, axis=0)                               # (D,)
        centered = flat - self.mean
        self.covariance = (centered.T @ centered) / dataset.shape[0]     # (D, D)
        eye = jnp.eye(d, dtype=jnp.float32)
        self.induced_linear = self.covariance @ jnp.linalg.inv(
            self.covariance + self.noise_variance * eye)                 # (D, D)
        self.induced_bias = (eye - self.induced_linear) @ self.mean      # (D,)

        # Pre-transposed, low-precision weight streamed by the kernel (weight
        # bytes dominate HBM traffic when B is small); bias and accumulation
        # stay f32.  Pass compute_dtype=jnp.float32 for an exact fallback.
        # TODO(synk): optional int8 (v5e/v6e) / fp8 (v7x) weight quantization
        # with per-row scales, gated on chip version, for ~2x on the HBM-bound
        # path.
        self.compute_dtype = compute_dtype
        self._weight_lp_t = jnp.asarray(self.induced_linear).T.astype(compute_dtype)
        self._bias_f32 = self.induced_bias.astype(jnp.float32)

    def get_mapping(self):
        return (self.induced_linear, self.induced_bias)

    def __call__(self, x: jnp.ndarray) -> jnp.ndarray:
        B = x.shape[0]
        d = math.prod(self.input_shape)
        # nn.Flatten-equivalent row-major flatten; cast activations to the MXU
        # compute dtype (tiny vs. the D*D weight stream).
        x_flat = x.reshape(B, d).astype(self.compute_dtype)
        y_flat = affine_denoise_flat(
            x_flat, self._weight_lp_t, self._bias_f32, out_dtype=jnp.float32)
        return y_flat.reshape((B,) + tuple(self.input_shape))


if __name__ == "__main__":
    key = jax.random.PRNGKey(0)
    k_data, k_x = jax.random.split(key)

    # Small shapes: dataset of 64 samples, images (4, 16, 16) -> D = 1024.
    N, C, H, W = 64, 4, 16, 16
    dataset = jax.random.normal(k_data, (N, C, H, W), dtype=jnp.float32)
    noise_std = 0.5

    denoiser = OptimalAffineDenoiserJAX(dataset, noise_std)

    # Noisy input batch.
    B = 2
    x = jax.random.normal(k_x, (B, C, H, W), dtype=jnp.float32)

    y = denoiser(x)
    y = jax.block_until_ready(y)

    # Reference checks.
    D = C * H * W
    x_flat = x.reshape(B, D)

    # (a) bit-comparable reference: same bf16 inputs/weight, f32 accumulation.
    ref_bf16 = (jnp.dot(x_flat.astype(jnp.bfloat16), denoiser._weight_lp_t,
                        preferred_element_type=jnp.float32)
                + denoiser._bias_f32).reshape(B, C, H, W)
    # (b) full-f32 reference (original module semantics); loose tol covers the
    #     bf16 weight rounding.
    ref_f32 = (x_flat @ denoiser.induced_linear.T + denoiser.induced_bias
               ).reshape(B, C, H, W)

    assert y.shape == (B, C, H, W)
    assert jnp.allclose(y, ref_bf16, atol=2e-3, rtol=2e-3), "mismatch vs bf16 ref"
    assert jnp.allclose(y, ref_f32, atol=3e-2, rtol=3e-2), "mismatch vs f32 ref"

    print("KERNEL_OK")
</pallas_src>

<mosaic_0001>
module attributes {stable_mosaic.version = 11 : i64} {
  func.func @_affine_kernel(%arg0: i32, %arg1: i32, %arg2: memref<2x1024xbf16, #tpu.memory_space<vmem>>, %arg3: memref<1024x512xbf16, #tpu.memory_space<vmem>>, %arg4: memref<1x512xf32, #tpu.memory_space<vmem>>, %arg5: memref<2x512xf32, #tpu.memory_space<vmem>>) attributes {dimension_semantics = [#tpu.dimension_semantics<parallel>, #tpu.dimension_semantics<parallel>], iteration_bounds = array<i64: 1, 2>, scalar_prefetch = 0 : i64, scratch_operands = 0 : i64, tpu.core_type = #tpu.core_type<tc>, window_params = [{transform_indices = @transform_0, window_bounds = array<i64: 2, 1024>}, {transform_indices = @transform_1, window_bounds = array<i64: 1024, 512>}, {transform_indices = @transform_2, window_bounds = array<i64: 1, 512>}, {transform_indices = @transform_3, window_bounds = array<i64: 2, 512>}]} {
    %c0 = arith.constant 0 : index
    %c0_0 = arith.constant 0 : index
    %0 = vector.load %arg2[%c0, %c0_0] : memref<2x1024xbf16, #tpu.memory_space<vmem>>, vector<2x1024xbf16>
    %c0_1 = arith.constant 0 : index
    %c0_2 = arith.constant 0 : index
    %1 = vector.load %arg3[%c0_1, %c0_2] : memref<1024x512xbf16, #tpu.memory_space<vmem>>, vector<1024x512xbf16>
    %cst = arith.constant dense<0.000000e+00> : vector<2x512xf32>
    %2 = tpu.matmul %0, %1, %cst {dimension_numbers = #tpu.dot_dimension_numbers<[1], [0], [0], [1], [0, 0, 1, 1], [], []>} : vector<2x1024xbf16>, vector<1024x512xbf16>, vector<2x512xf32> -> vector<2x512xf32>
    %c0_3 = arith.constant 0 : index
    %c0_4 = arith.constant 0 : index
    %3 = vector.load %arg4[%c0_3, %c0_4] : memref<1x512xf32, #tpu.memory_space<vmem>>, vector<1x512xf32>
    %4 = vector.broadcast %3 : vector<1x512xf32> to vector<2x512xf32>
    %5 = arith.addf %2, %4 : vector<2x512xf32>
    %c0_5 = arith.constant 0 : index
    %c0_6 = arith.constant 0 : index
    %6 = vector.load %arg5[%c0_5, %c0_6] : memref<2x512xf32, #tpu.memory_space<vmem>>, vector<2x512xf32>
    tpu.vector_store %arg5[%c0_5, %c0_6], %5 {strides = array<i32>} : memref<2x512xf32, #tpu.memory_space<vmem>>, vector<2x512xf32>,
    return
  }
  func.func @transform_0(%arg0: i32, %arg1: i32) -> (i32, i32) {
    %c0_i32 = arith.constant 0 : i32
    %c0_i32_0 = arith.constant 0 : i32
    return %arg0, %c0_i32 : i32, i32
  }
  func.func @transform_1(%arg0: i32, %arg1: i32) -> (i32, i32) {
    %c0_i32 = arith.constant 0 : i32
    %c0_i32_0 = arith.constant 0 : i32
    return %c0_i32, %arg1 : i32, i32
  }
  func.func @transform_2(%arg0: i32, %arg1: i32) -> (i32, i32) {
    %c0_i32 = arith.constant 0 : i32
    %c0_i32_0 = arith.constant 0 : i32
    return %c0_i32, %arg1 : i32, i32
  }
  func.func @transform_3(%arg0: i32, %arg1: i32) -> (i32, i32) {
    %c0_i32 = arith.constant 0 : i32
    return %arg0, %arg1 : i32, i32
  }
}

</mosaic_0001>

<llo_original>
// kernel: tpu_custom_call.1
$region0: #{tpu_custom_call.1}
  #allocation0 [shape = 'u32[]', space=smem, size = 0x4, offset = 0x4, fixed_abs, tag = 'smem constant byte address 0x4 - core index']
  #allocation1 [shape = 'u32[144,128]{1,0:T(1,128)}', space=vmem, size = 0x12000, scoped, tag = 'internal scratch']
  %s0 = inlined_call_operand.hbm [shape: bf16[2,1024], index: 0, kind: input, shape index: {}]
  %s1 = inlined_call_operand.hbm [shape: bf16[1024,1024], index: 1, kind: input, shape index: {}]
  %s2 = inlined_call_operand.hbm [shape: f32[1,1024], index: 2, kind: input, shape index: {}]
  %s3 = inlined_call_operand.hbm [shape: f32[2,1024], index: 3, kind: output, shape index: {}]
  %s4 = sld [smem:[#allocation0]]
  $region57: #{tpu_custom_call.1} parent=0
    _
  %s6 = ssub.s32 1, %s4
  %s7 = scalar_select 0, %s6, %s4
  $region1: #{tpu_custom_call.1} parent=0
    #allocation2 [shape = 'u8[4096]{0}', space=vmem, size = 0x1000, scoped, tag = 'input window, operand 0, single buffered']
    #allocation3 [shape = 's32[2]{0}', space=sflag, size = 0x8, scoped, tag = 'scoped memory for tpu_custom_call.1']
    #allocation4 [shape = 's32[2]{0}', space=sflag, size = 0x8, scoped, tag = 'scoped memory for tpu_custom_call.1']
    #allocation5 [shape = 'u8[2097152]{0}', space=vmem, size = 0x200000, scoped, tag = 'input window, operand 1']
    #allocation6 [shape = 's32[2]{0}', space=sflag, size = 0x8, scoped, tag = 'scoped memory for tpu_custom_call.1']
    #allocation7 [shape = 'u8[4096]{0}', space=vmem, size = 0x1000, scoped, tag = 'input window, operand 2']
    #allocation8 [shape = 'u8[8192]{0}', space=vmem, size = 0x2000, scoped, tag = 'output window, operand 0']
    %8 = vsyncpa [#allocation3], 0
    %9 = vsyncpa [#allocation6], 0
    %s10 = scalar_lea.sflag [#allocation6], 1
    %11 = vsyncpa %s10, 0
    %12 = vsyncpa [#allocation4], 0
    %s13 = scalar_lea.sflag [#allocation4], 1
    %14 = vsyncpa %s13, 0
    loop: start=0, step=1, limit=4
    $region2: #{tpu_custom_call.1} parent=1 // loop_pre_header
      _
    $region3: #{tpu_custom_call.1} parent=1 // loop_header
      %s16 = sphi 0, %s20
      %p17 = scmp.ge.s32.totalorder %s16, 4
      %s23 = sphi 0, %s35
      %s24 = sphi 0, %s31
      %s25 = sphi 0, %s23
      %s26 = sphi 0, %s24
      %s27 = sphi 0, %s25
      %s28 = sphi 0, %s26
      %s38 = sphi 0, %s40
      %s41 = sphi 0, %s38
      %s42 = sphi 0, %s41
      %s58 = sphi 0, %s42
      %s64 = sphi 0, %s66
      %s67 = sphi 0, %s64
      %s68 = sphi 0, %s67
      %s84 = sphi 0, %s68
      %s90 = sphi 0, %s92
      %s93 = sphi 0, %s90
      %s94 = sphi 0, %s93
      %s110 = sphi 0, %s94
      %s118 = sphi 0, %s120
      %s121 = sphi 0, %s118
      %s122 = sphi 0, %s121
      %s138 = sphi 0, %s122
    $region4: #{tpu_custom_call.1} parent=1 // loop_header_branch
      %19 = sbr.rel (%p17) target = $region8
    $region5: #{tpu_custom_call.1} parent=1 // loop_body
      %s21 = ssub.s32 %s16, 1
      %s22 = ssub.s32 %s16, 2
      %s29 = sadd.s32 1, %s24
      %p30 = scmp.ge.s32.totalorder %s29, 2
      %s31 = scalar_select %p30, 0, %s29
      %s32 = sadd.s32 1, %s23
      %s33 = scalar_select %p30, %s32, %s23
      %p34 = scmp.ge.s32.totalorder %s33, 1
      %s35 = scalar_select %p34, 0, %s33
      %s36 = ssub.s32 %s23, %s35
      %p37 = scmp.eq.s32.totalorder %s36, 0
      %s39 = sadd.s32 %s38, 1
      %s40 = scalar_select %p37, %s38, %s39
      %p43 = pneg %p37
      %p44 = scmp.eq.s32.totalorder %s16, 1
      %p45 = por %p43, %p44
      %p46 = scmp.ne.s32.totalorder %s38, %s41
      %p47 = scmp.eq.s32.totalorder %s16, 0
      %p48 = por %p46, %p47
      %p49 = scmp.ne.s32.totalorder %s38, %s41
      %p50 = scmp.eq.s32.totalorder %s21, 1
      %p51 = por %p49, %p50
      %p52 = scmp.ne.s32.totalorder %s41, %s42
      %p53 = scmp.eq.s32.totalorder %s21, 0
      %p54 = por %p52, %p53
      %p55 = scmp.ne.s32.totalorder %s41, %s42
      %p56 = scmp.eq.s32.totalorder %s22, 1
      %p57 = por %p55, %p56
      %p59 = scmp.ne.s32.totalorder %s42, %s58
      %p60 = scmp.eq.s32.totalorder %s22, 0
      %p61 = por %p59, %p60
      %s62 = ssub.s32 %s24, %s31
      %p63 = scmp.eq.s32.totalorder %s62, 0
      %s65 = sadd.s32 %s64, 1
      %s66 = scalar_select %p63, %s64, %s65
      %p69 = pneg %p63
      %p70 = scmp.eq.s32.totalorder %s16, 1
      %p71 = por %p69, %p70
      %p72 = scmp.ne.s32.totalorder %s64, %s67
      %p73 = scmp.eq.s32.totalorder %s16, 0
      %p74 = por %p72, %p73
      %p75 = scmp.ne.s32.totalorder %s64, %s67
      %p76 = scmp.eq.s32.totalorder %s21, 1
      %p77 = por %p75, %p76
      %p78 = scmp.ne.s32.totalorder %s67, %s68
      %p79 = scmp.eq.s32.totalorder %s21, 0
      %p80 = por %p78, %p79
      %p81 = scmp.ne.s32.totalorder %s67, %s68
      %p82 = scmp.eq.s32.totalorder %s22, 1
      %p83 = por %p81, %p82
      %p85 = scmp.ne.s32.totalorder %s68, %s84
      %p86 = scmp.eq.s32.totalorder %s22, 0
      %p87 = por %p85, %p86
      %s88 = ssub.s32 %s24, %s31
      %p89 = scmp.eq.s32.totalorder %s88, 0
      %s91 = sadd.s32 %s90, 1
      %s92 = scalar_select %p89, %s90, %s91
      %p95 = pneg %p89
      %p96 = scmp.eq.s32.totalorder %s16, 1
      %p97 = por %p95, %p96
      %p98 = scmp.ne.s32.totalorder %s90, %s93
      %p99 = scmp.eq.s32.totalorder %s16, 0
      %p100 = por %p98, %p99
      %p101 = scmp.ne.s32.totalorder %s90, %s93
      %p102 = scmp.eq.s32.totalorder %s21, 1
      %p103 = por %p101, %p102
      %p104 = scmp.ne.s32.totalorder %s93, %s94
      %p105 = scmp.eq.s32.totalorder %s21, 0
      %p106 = por %p104, %p105
      %p107 = scmp.ne.s32.totalorder %s93, %s94
      %p108 = scmp.eq.s32.totalorder %s22, 1
      %p109 = por %p107, %p108
      %p111 = scmp.ne.s32.totalorder %s94, %s110
      %p112 = scmp.eq.s32.totalorder %s22, 0
      %p113 = por %p111, %p112
      %s114 = ssub.s32 %s23, %s35
      %s115 = ssub.s32 %s24, %s31
      %s116 = sor.u32 %s114, %s115
      %p117 = scmp.eq.s32.totalorder %s116, 0
      %s119 = sadd.s32 %s118, 1
      %s120 = scalar_select %p117, %s118, %s119
      %p123 = pneg %p117
      %p124 = scmp.eq.s32.totalorder %s16, 1
      %p125 = por %p123, %p124
      %p126 = scmp.ne.s32.totalorder %s118, %s121
      %p127 = scmp.eq.s32.totalorder %s16, 0
      %p128 = por %p126, %p127
      %p129 = scmp.ne.s32.totalorder %s118, %s121
      %p130 = scmp.eq.s32.totalorder %s21, 1
      %p131 = por %p129, %p130
      %p132 = scmp.ne.s32.totalorder %s121, %s122
      %p133 = scmp.eq.s32.totalorder %s21, 0
      %p134 = por %p132, %p133
      %p135 = scmp.ne.s32.totalorder %s121, %s122
      %p136 = scmp.eq.s32.totalorder %s22, 1
      %p137 = por %p135, %p136
      %p139 = scmp.ne.s32.totalorder %s122, %s138
      %p140 = scmp.eq.s32.totalorder %s22, 0
      %p141 = por %p139, %p140
      %p142 = scmp.le.s32.totalorder 1, %s16
      %p143 = scmp.lt.s32.totalorder %s16, 3
      %p144 = pnand %p142, %p143
      %p145 = pneg %p144
      // Predicated region
      $region9: #{tpu_custom_call.1} parent=5 // pred_check
        _
      $region10: #{tpu_custom_call.1} parent=5 // pred_check_branch
        %147 = sbr.rel (%p144) target = $region12
      $region11: #{tpu_custom_call.1} parent=5 // pred_region
        %s148 = ssub.s32 %s16, 1
        // Predicated region
        $region13: #{tpu_custom_call.1} parent=11 // pred_check
          %p149 = pneg %p54
        $region14: #{tpu_custom_call.1} parent=11 // pred_check_branch
          %151 = sbr.rel (%p149) target = $region16
        $region15: #{tpu_custom_call.1} parent=11 // pred_region
          %s153 = ssub.s32 128, 128
          %154 = vsyncadd [#allocation3], %s153
          %s155 = smul.addr %s25, 8
          %s156 = smul.addr %s155, 16
          %s157 = scalar_lea.hbm %s0, %s156
          %s159 = sshll.u32 [#allocation2], 4
          %s160 = int_to_ptr.vmem [resolvable:$true] %s159
          %162 = dma.hbm_to_vmem [thread:$0]  %s157, 128, %s160, [#allocation3]
        $region16: #{tpu_custom_call.1} parent=11 // pred_fallthru
          _
      $region12: #{tpu_custom_call.1} parent=5 // pred_fallthru
        _
      %p163 = scmp.lt.s32.totalorder %s16, 2
      // Predicated region
      $region17: #{tpu_custom_call.1} parent=5 // pred_check
        %p164 = pneg %p163
      $region18: #{tpu_custom_call.1} parent=5 // pred_check_branch
        %166 = sbr.rel (%p164) target = $region20
      $region19: #{tpu_custom_call.1} parent=5 // pred_region
        // Predicated region
        $region21: #{tpu_custom_call.1} parent=19 // pred_check
          %p167 = pneg %p74
        $region22: #{tpu_custom_call.1} parent=19 // pred_check_branch
          %169 = sbr.rel (%p167) target = $region24
        $region23: #{tpu_custom_call.1} parent=19 // pred_region
          %s170 = sand.u32 %s16, 1
          %s171 = scalar_lea.sflag [#allocation6], %s170
          %s172 = sand.u32 %s64, 1
          %s173 = smul.addr %s172, 2048
          %s174 = scalar_lea.vmem [#allocation5], %s173
          %s175 = smul.u32 4, %s24
          %s177 = ssub.s32 32768, 32768
          %178 = vsyncadd %s171, %s177
          %s179 = smul.addr %s175, 64
          %s180 = scalar_lea.hbm %s1, %s179
          %s181 = sshll.u32 %s174, 4
          %s182 = int_to_ptr.vmem [resolvable:$true] %s181
          %187 = dma.hbm_to_vmem [thread:$0]  %s180, 32768, %s182, %s171, 512, 256, 16
        $region24: #{tpu_custom_call.1} parent=19 // pred_fallthru
          _
        // Predicated region
        $region25: #{tpu_custom_call.1} parent=19 // pred_check
          %p188 = pneg %p100
        $region26: #{tpu_custom_call.1} parent=19 // pred_check_branch
          %190 = sbr.rel (%p188) target = $region28
        $region27: #{tpu_custom_call.1} parent=19 // pred_region
          %s191 = sand.u32 %s16, 1
          %s192 = scalar_lea.sflag [#allocation6], %s191
          %s193 = sand.u32 %s90, 1
          %s194 = smul.addr %s193, 4
          %s195 = scalar_lea.vmem [#allocation7], %s194
          %s196 = smul.u32 4, %s24
          %s198 = ssub.s32 64, 64
          %199 = vsyncadd %s192, %s198
          %s200 = smul.addr %s196, 16
          %s201 = scalar_lea.hbm %s2, %s200
          %s203 = sshll.u32 %s195, 4
          %s204 = int_to_ptr.vmem [resolvable:$true] %s203
          %206 = dma.hbm_to_vmem [thread:$0]  %s201, 64, %s204, %s192
        $region28: #{tpu_custom_call.1} parent=19 // pred_fallthru
          _
      $region20: #{tpu_custom_call.1} parent=5 // pred_fallthru
        _
      %p207 = scmp.le.s32.totalorder 1, %s16
      %p208 = scmp.lt.s32.totalorder %s16, 3
      %p209 = pnand %p207, %p208
      %p210 = pneg %p209
      // Predicated region
      $region29: #{tpu_custom_call.1} parent=5 // pred_check
        _
      $region30: #{tpu_custom_call.1} parent=5 // pred_check_branch
        %212 = sbr.rel (%p209) target = $region32
      $region31: #{tpu_custom_call.1} parent=5 // pred_region
        %s213 = ssub.s32 %s16, 1
        // Predicated region
        $region33: #{tpu_custom_call.1} parent=31 // pred_check
          %p214 = pneg %p54
        $region34: #{tpu_custom_call.1} parent=31 // pred_check_branch
          %216 = sbr.rel (%p214) target = $region36
        $region35: #{tpu_custom_call.1} parent=31 // pred_region
          %217 = dma.done [#allocation3], 128
        $region36: #{tpu_custom_call.1} parent=31 // pred_fallthru
          _
        %s218 = sand.u32 %s21, 1
        %s219 = scalar_lea.sflag [#allocation6], %s218
        %s220 = sand.u32 %s67, 1
        %s221 = smul.addr %s220, 2048
        %s222 = scalar_lea.vmem [#allocation5], %s221
        // Predicated region
        $region37: #{tpu_custom_call.1} parent=31 // pred_check
          %p223 = pneg %p80
        $region38: #{tpu_custom_call.1} parent=31 // pred_check_branch
          %225 = sbr.rel (%p223) target = $region40
        $region39: #{tpu_custom_call.1} parent=31 // pred_region
          %226 = dma.done %s219, 32768
        $region40: #{tpu_custom_call.1} parent=31 // pred_fallthru
          _
        %s227 = sand.u32 %s21, 1
        %s228 = scalar_lea.sflag [#allocation6], %s227
        %s229 = sand.u32 %s93, 1
        %s230 = smul.addr %s229, 4
        %s231 = scalar_lea.vmem [#allocation7], %s230
        // Predicated region
        $region41: #{tpu_custom_call.1} parent=31 // pred_check
          %p232 = pneg %p106
        $region42: #{tpu_custom_call.1} parent=31 // pred_check_branch
          %234 = sbr.rel (%p232) target = $region44
        $region43: #{tpu_custom_call.1} parent=31 // pred_region
          %235 = dma.done %s228, 64
        $region44: #{tpu_custom_call.1} parent=31 // pred_fallthru
          _
        %p236 = pneg %p54
        %p237 = pneg %p51
        %s238 = sand.u32 %s21, 1
        %s239 = scalar_lea.sflag [#allocation6], %s238
        %s240 = sand.u32 %s67, 1
        %s241 = smul.addr %s240, 2048
        %s242 = scalar_lea.vmem [#allocation5], %s241
        %p243 = pneg %p80
        %p244 = pneg %p77
        %s245 = sand.u32 %s21, 1
        %s246 = scalar_lea.sflag [#allocation6], %s245
        %s247 = sand.u32 %s93, 1
        %s248 = smul.addr %s247, 4
        %s249 = scalar_lea.vmem [#allocation7], %s248
        %p250 = pneg %p106
        %p251 = pneg %p103
        %p252 = pneg %p134
        %p253 = pneg %p131
        %s254 = sand.u32 %s121, 1
        %s255 = scalar_lea.sflag [#allocation4], %s254
        %s256 = sand.u32 %s121, 1
        %s257 = smul.addr %s256, 8
        %s258 = scalar_lea.vmem [#allocation8], %s257
        %s259 = smul.u32 4, %s26
        %s260 = smul.u32 4, %s26
        %s261 = smul.u32 4, %s26
        %v262 = vld [vmem:[#allocation2] sm:$0xff]
        %v263 = vld [vmem:[%s222] sm:$0xff]
        %v264 = vld [vmem:[%s222 + $0x8] sm:$0xff]
        %v265 = vld [vmem:[%s222 + $0x10] sm:$0xff]
        %v266 = vld [vmem:[%s222 + $0x18] sm:$0xff]
        %v267 = vld [vmem:[%s222 + $0x20] sm:$0xff]
        %v268 = vld [vmem:[%s222 + $0x28] sm:$0xff]
        %v269 = vld [vmem:[%s222 + $0x30] sm:$0xff]
        %v270 = vld [vmem:[%s222 + $0x38] sm:$0xff]
        %v271 = vld [vmem:[%s222 + $0x40] sm:$0xff]
        %v272 = vld [vmem:[%s222 + $0x48] sm:$0xff]
        %v273 = vld [vmem:[%s222 + $0x50] sm:$0xff]
        %v274 = vld [vmem:[%s222 + $0x58] sm:$0xff]
        %v275 = vld [vmem:[%s222 + $0x60] sm:$0xff]
        %v276 = vld [vmem:[%s222 + $0x68] sm:$0xff]
        %v277 = vld [vmem:[%s222 + $0x70] sm:$0xff]
        %v278 = vld [vmem:[%s222 + $0x78] sm:$0xff]
        %v279 = vld [vmem:[%s222 + $0x80] sm:$0xff]
        %v280 = vld [vmem:[%s222 + $0x88] sm:$0xff]
        %v281 = vld [vmem:[%s222 + $0x90] sm:$0xff]
        %v282 = vld [vmem:[%s222 + $0x98] sm:$0xff]
        %v283 = vld [vmem:[%s222 + $0xa0] sm:$0xff]
        %v284 = vld [vmem:[%s222 + $0xa8] sm:$0xff]
        %v285 = vld [vmem:[%s222 + $0xb0] sm:$0xff]
        %v286 = vld [vmem:[%s222 + $0xb8] sm:$0xff]
        %v287 = vld [vmem:[%s222 + $0xc0] sm:$0xff]
        %v288 = vld [vmem:[%s222 + $0xc8] sm:$0xff]
        %v289 = vld [vmem:[%s222 + $0xd0] sm:$0xff]
        %v290 = vld [vmem:[%s222 + $0xd8] sm:$0xff]
        %v291 = vld [vmem:[%s222 + $0xe0] sm:$0xff]
        %v292 = vld [vmem:[%s222 + $0xe8] sm:$0xff]
        %v293 = vld [vmem:[%s222 + $0xf0] sm:$0xff]
        %v294 = vld [vmem:[%s222 + $0xf8] sm:$0xff]
        %v295 = vld [vmem:[%s222 + $0x100] sm:$0xff]
        %v296 = vld [vmem:[%s222 + $0x108] sm:$0xff]
        %v297 = vld [vmem:[%s222 + $0x110] sm:$0xff]
        %v298 = vld [vmem:[%s222 + $0x118] sm:$0xff]
        %v299 = vld [vmem:[%s222 + $0x120] sm:$0xff]
        %v300 = vld [vmem:[%s222 + $0x128] sm:$0xff]
        %v301 = vld [vmem:[%s222 + $0x130] sm:$0xff]
        %v302 = vld [vmem:[%s222 + $0x138] sm:$0xff]
        %v303 = vld [vmem:[%s222 + $0x140] sm:$0xff]
        %v304 = vld [vmem:[%s222 + $0x148] sm:$0xff]
        %v305 = vld [vmem:[%s222 + $0x150] sm:$0xff]
        %v306 = vld [vmem:[%s222 + $0x158] sm:$0xff]
        %v307 = vld [vmem:[%s222 + $0x160] sm:$0xff]
        %v308 = vld [vmem:[%s222 + $0x168] sm:$0xff]
        %v309 = vld [vmem:[%s222 + $0x170] sm:$0xff]
        %v310 = vld [vmem:[%s222 + $0x178] sm:$0xff]
        %v311 = vld [vmem:[%s222 + $0x180] sm:$0xff]
        %v312 = vld [vmem:[%s222 + $0x188] sm:$0xff]
        %v313 = vld [vmem:[%s222 + $0x190] sm:$0xff]
        %v314 = vld [vmem:[%s222 + $0x198] sm:$0xff]
        %v315 = vld [vmem:[%s222 + $0x1a0] sm:$0xff]
        %v316 = vld [vmem:[%s222 + $0x1a8] sm:$0xff]
        %v317 = vld [vmem:[%s222 + $0x1b0] sm:$0xff]
        %v318 = vld [vmem:[%s222 + $0x1b8] sm:$0xff]
        %v319 = vld [vmem:[%s222 + $0x1c0] sm:$0xff]
        %v320 = vld [vmem:[%s222 + $0x1c8] sm:$0xff]
        %v321 = vld [vmem:[%s222 + $0x1d0] sm:$0xff]
        %v322 = vld [vmem:[%s222 + $0x1d8] sm:$0xff]
        %v323 = vld [vmem:[%s222 + $0x1e0] sm:$0xff]
        %v324 = vld [vmem:[%s222 + $0x1e8] sm:$0xff]
        %v325 = vld [vmem:[%s222 + $0x1f0] sm:$0xff]
        %v326 = vld [vmem:[%s222 + $0x1f8] sm:$0xff]
        %v327 = vld [vmem:[%s222 + $0x200] sm:$0xff]
        %v328 = vld [vmem:[%s222 + $0x208] sm:$0xff]
        %v329 = vld [vmem:[%s222 + $0x210] sm:$0xff]
        %v330 = vld [vmem:[%s222 + $0x218] sm:$0xff]
        %v331 = vld [vmem:[%s222 + $0x220] sm:$0xff]
        %v332 = vld [vmem:[%s222 + $0x228] sm:$0xff]
        %v333 = vld [vmem:[%s222 + $0x230] sm:$0xff]
        %v334 = vld [vmem:[%s222 + $0x238] sm:$0xff]
        %v335 = vld [vmem:[%s222 + $0x240] sm:$0xff]
        %v336 = vld [vmem:[%s222 + $0x248] sm:$0xff]
        %v337 = vld [vmem:[%s222 + $0x250] sm:$0xff]
        %v338 = vld [vmem:[%s222 + $0x258] sm:$0xff]
        %v339 = vld [vmem:[%s222 + $0x260] sm:$0xff]
        %v340 = vld [vmem:[%s222 + $0x268] sm:$0xff]
        %v341 = vld [vmem:[%s222 + $0x270] sm:$0xff]
        %v342 = vld [vmem:[%s222 + $0x278] sm:$0xff]
        %v343 = vld [vmem:[%s222 + $0x280] sm:$0xff]
        %v344 = vld [vmem:[%s222 + $0x288] sm:$0xff]
        %v345 = vld [vmem:[%s222 + $0x290] sm:$0xff]
        %v346 = vld [vmem:[%s222 + $0x298] sm:$0xff]
        %v347 = vld [vmem:[%s222 + $0x2a0] sm:$0xff]
        %v348 = vld [vmem:[%s222 + $0x2a8] sm:$0xff]
        %v349 = vld [vmem:[%s222 + $0x2b0] sm:$0xff]
        %v350 = vld [vmem:[%s222 + $0x2b8] sm:$0xff]
        %v351 = vld [vmem:[%s222 + $0x2c0] sm:$0xff]
        %v352 = vld [vmem:[%s222 + $0x2c8] sm:$0xff]
        %v353 = vld [vmem:[%s222 + $0x2d0] sm:$0xff]
        %v354 = vld [vmem:[%s222 + $0x2d8] sm:$0xff]
        %v355 = vld [vmem:[%s222 + $0x2e0] sm:$0xff]
        %v356 = vld [vmem:[%s222 + $0x2e8] sm:$0xff]
        %v357 = vld [vmem:[%s222 + $0x2f0] sm:$0xff]
        %v358 = vld [vmem:[%s222 + $0x2f8] sm:$0xff]
        %v359 = vld [vmem:[%s222 + $0x300] sm:$0xff]
        %v360 = vld [vmem:[%s222 + $0x308] sm:$0xff]
        %v361 = vld [vmem:[%s222 + $0x310] sm:$0xff]
        %v362 = vld [vmem:[%s222 + $0x318] sm:$0xff]
        %v363 = vld [vmem:[%s222 + $0x320] sm:$0xff]
        %v364 = vld [vmem:[%s222 + $0x328] sm:$0xff]
        %v365 = vld [vmem:[%s222 + $0x330] sm:$0xff]
        %v366 = vld [vmem:[%s222 + $0x338] sm:$0xff]
        %v367 = vld [vmem:[%s222 + $0x340] sm:$0xff]
        %v368 = vld [vmem:[%s222 + $0x348] sm:$0xff]
        %v369 = vld [vmem:[%s222 + $0x350] sm:$0xff]
        %v370 = vld [vmem:[%s222 + $0x358] sm:$0xff]
        %v371 = vld [vmem:[%s222 + $0x360] sm:$0xff]
        %v372 = vld [vmem:[%s222 + $0x368] sm:$0xff]
        %v373 = vld [vmem:[%s222 + $0x370] sm:$0xff]
        %v374 = vld [vmem:[%s222 + $0x378] sm:$0xff]
        %v375 = vld [vmem:[%s222 + $0x380] sm:$0xff]
        %v376 = vld [vmem:[%s222 + $0x388] sm:$0xff]
        %v377 = vld [vmem:[%s222 + $0x390] sm:$0xff]
        %v378 = vld [vmem:[%s222 + $0x398] sm:$0xff]
        %v379 = vld [vmem:[%s222 + $0x3a0] sm:$0xff]
        %v380 = vld [vmem:[%s222 + $0x3a8] sm:$0xff]
        %v381 = vld [vmem:[%s222 + $0x3b0] sm:$0xff]
        %v382 = vld [vmem:[%s222 + $0x3b8] sm:$0xff]
        %v383 = vld [vmem:[%s222 + $0x3c0] sm:$0xff]
        %v384 = vld [vmem:[%s222 + $0x3c8] sm:$0xff]
        %v385 = vld [vmem:[%s222 + $0x3d0] sm:$0xff]
        %v386 = vld [vmem:[%s222 + $0x3d8] sm:$0xff]
        %v387 = vld [vmem:[%s222 + $0x3e0] sm:$0xff]
        %v388 = vld [vmem:[%s222 + $0x3e8] sm:$0xff]
        %v389 = vld [vmem:[%s222 + $0x3f0] sm:$0xff]
        %v390 = vld [vmem:[%s222 + $0x3f8] sm:$0xff]
        %v391 = vld [vmem:[%s222 + $0x400] sm:$0xff]
        %v392 = vld [vmem:[%s222 + $0x408] sm:$0xff]
        %v393 = vld [vmem:[%s222 + $0x410] sm:$0xff]
        %v394 = vld [vmem:[%s222 + $0x418] sm:$0xff]
        %v395 = vld [vmem:[%s222 + $0x420] sm:$0xff]
        %v396 = vld [vmem:[%s222 + $0x428] sm:$0xff]
        %v397 = vld [vmem:[%s222 + $0x430] sm:$0xff]
        %v398 = vld [vmem:[%s222 + $0x438] sm:$0xff]
        %v399 = vld [vmem:[%s222 + $0x440] sm:$0xff]
        %v400 = vld [vmem:[%s222 + $0x448] sm:$0xff]
        %v401 = vld [vmem:[%s222 + $0x450] sm:$0xff]
        %v402 = vld [vmem:[%s222 + $0x458] sm:$0xff]
        %v403 = vld [vmem:[%s222 + $0x460] sm:$0xff]
        %v404 = vld [vmem:[%s222 + $0x468] sm:$0xff]
        %v405 = vld [vmem:[%s222 + $0x470] sm:$0xff]
        %v406 = vld [vmem:[%s222 + $0x478] sm:$0xff]
        %v407 = vld [vmem:[%s222 + $0x480] sm:$0xff]
        %v408 = vld [vmem:[%s222 + $0x488] sm:$0xff]
        %v409 = vld [vmem:[%s222 + $0x490] sm:$0xff]
        %v410 = vld [vmem:[%s222 + $0x498] sm:$0xff]
        %v411 = vld [vmem:[%s222 + $0x4a0] sm:$0xff]
        %v412 = vld [vmem:[%s222 + $0x4a8] sm:$0xff]
        %v413 = vld [vmem:[%s222 + $0x4b0] sm:$0xff]
        %v414 = vld [vmem:[%s222 + $0x4b8] sm:$0xff]
        %v415 = vld [vmem:[%s222 + $0x4c0] sm:$0xff]
        %v416 = vld [vmem:[%s222 + $0x4c8] sm:$0xff]
        %v417 = vld [vmem:[%s222 + $0x4d0] sm:$0xff]
        %v418 = vld [vmem:[%s222 + $0x4d8] sm:$0xff]
        %v419 = vld [vmem:[%s222 + $0x4e0] sm:$0xff]
        %v420 = vld [vmem:[%s222 + $0x4e8] sm:$0xff]
        %v421 = vld [vmem:[%s222 + $0x4f0] sm:$0xff]
        %v422 = vld [vmem:[%s222 + $0x4f8] sm:$0xff]
        %v423 = vld [vmem:[%s222 + $0x500] sm:$0xff]
        %v424 = vld [vmem:[%s222 + $0x508] sm:$0xff]
        %v425 = vld [vmem:[%s222 + $0x510] sm:$0xff]
        %v426 = vld [vmem:[%s222 + $0x518] sm:$0xff]
        %v427 = vld [vmem:[%s222 + $0x520] sm:$0xff]
        %v428 = vld [vmem:[%s222 + $0x528] sm:$0xff]
        %v429 = vld [vmem:[%s222 + $0x530] sm:$0xff]
        %v430 = vld [vmem:[%s222 + $0x538] sm:$0xff]
        %v431 = vld [vmem:[%s222 + $0x540] sm:$0xff]
        %v432 = vld [vmem:[%s222 + $0x548] sm:$0xff]
        %v433 = vld [vmem:[%s222 + $0x550] sm:$0xff]
        %v434 = vld [vmem:[%s222 + $0x558] sm:$0xff]
        %v435 = vld [vmem:[%s222 + $0x560] sm:$0xff]
        %v436 = vld [vmem:[%s222 + $0x568] sm:$0xff]
        %v437 = vld [vmem:[%s222 + $0x570] sm:$0xff]
        %v438 = vld [vmem:[%s222 + $0x578] sm:$0xff]
        %v439 = vld [vmem:[%s222 + $0x580] sm:$0xff]
        %v440 = vld [vmem:[%s222 + $0x588] sm:$0xff]
        %v441 = vld [vmem:[%s222 + $0x590] sm:$0xff]
        %v442 = vld [vmem:[%s222 + $0x598] sm:$0xff]
        %v443 = vld [vmem:[%s222 + $0x5a0] sm:$0xff]
        %v444 = vld [vmem:[%s222 + $0x5a8] sm:$0xff]
        %v445 = vld [vmem:[%s222 + $0x5b0] sm:$0xff]
        %v446 = vld [vmem:[%s222 + $0x5b8] sm:$0xff]
        %v447 = vld [vmem:[%s222 + $0x5c0] sm:$0xff]
        %v448 = vld [vmem:[%s222 + $0x5c8] sm:$0xff]
        %v449 = vld [vmem:[%s222 + $0x5d0] sm:$0xff]
        %v450 = vld [vmem:[%s222 + $0x5d8] sm:$0xff]
        %v451 = vld [vmem:[%s222 + $0x5e0] sm:$0xff]
        %v452 = vld [vmem:[%s222 + $0x5e8] sm:$0xff]
        %v453 = vld [vmem:[%s222 + $0x5f0] sm:$0xff]
        %v454 = vld [vmem:[%s222 + $0x5f8] sm:$0xff]
        %v455 = vld [vmem:[%s222 + $0x600] sm:$0xff]
        %v456 = vld [vmem:[%s222 + $0x608] sm:$0xff]
        %v457 = vld [vmem:[%s222 + $0x610] sm:$0xff]
        %v458 = vld [vmem:[%s222 + $0x618] sm:$0xff]
        %v459 = vld [vmem:[%s222 + $0x620] sm:$0xff]
        %v460 = vld [vmem:[%s222 + $0x628] sm:$0xff]
        %v461 = vld [vmem:[%s222 + $0x630] sm:$0xff]
        %v462 = vld [vmem:[%s222 + $0x638] sm:$0xff]
        %v463 = vld [vmem:[%s222 + $0x640] sm:$0xff]
        %v464 = vld [vmem:[%s222 + $0x648] sm:$0xff]
        %v465 = vld [vmem:[%s222 + $0x650] sm:$0xff]
        %v466 = vld [vmem:[%s222 + $0x658] sm:$0xff]
        %v467 = vld [vmem:[%s222 + $0x660] sm:$0xff]
        %v468 = vld [vmem:[%s222 + $0x668] sm:$0xff]
        %v469 = vld [vmem:[%s222 + $0x670] sm:$0xff]
        %v470 = vld [vmem:[%s222 + $0x678] sm:$0xff]
        %v471 = vld [vmem:[%s222 + $0x680] sm:$0xff]
        %v472 = vld [vmem:[%s222 + $0x688] sm:$0xff]
        %v473 = vld [vmem:[%s222 + $0x690] sm:$0xff]
        %v474 = vld [vmem:[%s222 + $0x698] sm:$0xff]
        %v475 = vld [vmem:[%s222 + $0x6a0] sm:$0xff]
        %v476 = vld [vmem:[%s222 + $0x6a8] sm:$0xff]
        %v477 = vld [vmem:[%s222 + $0x6b0] sm:$0xff]
        %v478 = vld [vmem:[%s222 + $0x6b8] sm:$0xff]
        %v479 = vld [vmem:[%s222 + $0x6c0] sm:$0xff]
        %v480 = vld [vmem:[%s222 + $0x6c8] sm:$0xff]
        %v481 = vld [vmem:[%s222 + $0x6d0] sm:$0xff]
        %v482 = vld [vmem:[%s222 + $0x6d8] sm:$0xff]
        %v483 = vld [vmem:[%s222 + $0x6e0] sm:$0xff]
        %v484 = vld [vmem:[%s222 + $0x6e8] sm:$0xff]
        %v485 = vld [vmem:[%s222 + $0x6f0] sm:$0xff]
        %v486 = vld [vmem:[%s222 + $0x6f8] sm:$0xff]
        %v487 = vld [vmem:[%s222 + $0x700] sm:$0xff]
        %v488 = vld [vmem:[%s222 + $0x708] sm:$0xff]
        %v489 = vld [vmem:[%s222 + $0x710] sm:$0xff]
        %v490 = vld [vmem:[%s222 + $0x718] sm:$0xff]
        %v491 = vld [vmem:[%s222 + $0x720] sm:$0xff]
        %v492 = vld [vmem:[%s222 + $0x728] sm:$0xff]
        %v493 = vld [vmem:[%s222 + $0x730] sm:$0xff]
        %v494 = vld [vmem:[%s222 + $0x738] sm:$0xff]
        %v495 = vld [vmem:[%s222 + $0x740] sm:$0xff]
        %v496 = vld [vmem:[%s222 + $0x748] sm:$0xff]
        %v497 = vld [vmem:[%s222 + $0x750] sm:$0xff]
        %v498 = vld [vmem:[%s222 + $0x758] sm:$0xff]
        %v499 = vld [vmem:[%s222 + $0x760] sm:$0xff]
        %v500 = vld [vmem:[%s222 + $0x768] sm:$0xff]
        %v501 = vld [vmem:[%s222 + $0x770] sm:$0xff]
        %v502 = vld [vmem:[%s222 + $0x778] sm:$0xff]
        %v503 = vld [vmem:[%s222 + $0x780] sm:$0xff]
        %v504 = vld [vmem:[%s222 + $0x788] sm:$0xff]
        %v505 = vld [vmem:[%s222 + $0x790] sm:$0xff]
        %v506 = vld [vmem:[%s222 + $0x798] sm:$0xff]
        %v507 = vld [vmem:[%s222 + $0x7a0] sm:$0xff]
        %v508 = vld [vmem:[%s222 + $0x7a8] sm:$0xff]
        %v509 = vld [vmem:[%s222 + $0x7b0] sm:$0xff]
        %v510 = vld [vmem:[%s222 + $0x7b8] sm:$0xff]
        %v511 = vld [vmem:[%s222 + $0x7c0] sm:$0xff]
        %v512 = vld [vmem:[%s222 + $0x7c8] sm:$0xff]
        %v513 = vld [vmem:[%s222 + $0x7d0] sm:$0xff]
        %v514 = vld [vmem:[%s222 + $0x7d8] sm:$0xff]
        %v515 = vld [vmem:[%s222 + $0x7e0] sm:$0xff]
        %v516 = vld [vmem:[%s222 + $0x7e8] sm:$0xff]
        %v517 = vld [vmem:[%s222 + $0x7f0] sm:$0xff]
        %v518 = vld [vmem:[%s222 + $0x7f8] sm:$0xff]
        %v519 = vld [vmem:[%s231] sm:$0xf]
        %v521 = vlaneseq
        %v522 = vshrl.u32 %v521, 7
        %v523 = vsub.s32 0, %v522
        %v524 = vrot.slane %v519, %v523
        %v525 = vlaneseq
        %v526 = vshrl.u32 %v525, 7
        %v527 = vsub.s32 1, %v526
        %v528 = vrot.slane %v519, %v527
        %v529 = vlaneseq
        %v530 = vshrl.u32 %v529, 7
        %v531 = vsub.s32 2, %v530
        %v532 = vrot.slane %v519, %v531
        %v533 = vlaneseq
        %v534 = vshrl.u32 %v533, 7
        %v535 = vsub.s32 3, %v534
        %v536 = vrot.slane %v519, %v535
        %v542 = vcombine.high %v262, %v262
        %v544 = vunpack.c.l.s4 1966171168
        %v545 = vunpack.c.0.s8 %v544
        %v546 = vlaneseq
        %v547 = vshrl.u32 %v546, 7
        %v548 = vsub.s32 %v545, %v547
        %v549 = vrot.slane %v262, %v548
        %v551 = vunpack.c.l.s4 1966171168
        %v552 = vunpack.c.0.s8 %v551
        %v553 = vlaneseq
        %v554 = vshrl.u32 %v553, 7
        %v555 = vsub.s32 %v552, %v554
        %v556 = vrot.slane %v542, %v555
        %v557 = vcombine.high %v549, %v549
        %v558 = vcombine.high %v556, %v556
        %v560 = vunpack.c.l.s4 1966171168
        %v561 = vunpack.c.0.s8 %v560
        %v562 = vlaneseq
        %v563 = vshrl.u32 %v562, 7
        %v564 = vsub.s32 %v561, %v563
        %v565 = vrot.slane %v549, %v564
        %v567 = vunpack.c.l.s4 1966171168
        %v568 = vunpack.c.0.s8 %v567
        %v569 = vlaneseq
        %v570 = vshrl.u32 %v569, 7
        %v571 = vsub.s32 %v568, %v570
        %v572 = vrot.slane %v556, %v571
        %v574 = vunpack.c.l.s4 1966171168
        %v575 = vunpack.c.0.s8 %v574
        %v576 = vlaneseq
        %v577 = vshrl.u32 %v576, 7
        %v578 = vsub.s32 %v575, %v577
        %v579 = vrot.slane %v557, %v578
        %v581 = vunpack.c.l.s4 1966171168
        %v582 = vunpack.c.0.s8 %v581
        %v583 = vlaneseq
        %v584 = vshrl.u32 %v583, 7
        %v585 = vsub.s32 %v582, %v584
        %v586 = vrot.slane %v558, %v585
        %v587 = vcombine.high %v565, %v565
        %v588 = vcombine.high %v572, %v572
        %v589 = vcombine.high %v579, %v579
        %v590 = vcombine.high %v586, %v586
        %v855 = vunpack.c.l.b16 %v263
        %v856 = vunpack.c.h.b16 %v263
        %v857 = vunpack.c.l.b16 %v264
        %v858 = vunpack.c.h.b16 %v264
        %v859 = vunpack.c.l.b16 %v265
        %v860 = vunpack.c.h.b16 %v265
        %v861 = vunpack.c.l.b16 %v266
        %v862 = vunpack.c.h.b16 %v266
        %v863 = vunpack.c.l.b16 %v267
        %v864 = vunpack.c.h.b16 %v267
        %v865 = vunpack.c.l.b16 %v268
        %v866 = vunpack.c.h.b16 %v268
        %v867 = vunpack.c.l.b16 %v269
        %v868 = vunpack.c.h.b16 %v269
        %v869 = vunpack.c.l.b16 %v270
        %v870 = vunpack.c.h.b16 %v270
        %v871 = vunpack.c.l.b16 %v271
        %v872 = vunpack.c.h.b16 %v271
        %v873 = vunpack.c.l.b16 %v272
        %v874 = vunpack.c.h.b16 %v272
        %v875 = vunpack.c.l.b16 %v273
        %v876 = vunpack.c.h.b16 %v273
        %v877 = vunpack.c.l.b16 %v274
        %v878 = vunpack.c.h.b16 %v274
        %v879 = vunpack.c.l.b16 %v275
        %v880 = vunpack.c.h.b16 %v275
        %v881 = vunpack.c.l.b16 %v276
        %v882 = vunpack.c.h.b16 %v276
        %v883 = vunpack.c.l.b16 %v277
        %v884 = vunpack.c.h.b16 %v277
        %v885 = vunpack.c.l.b16 %v278
        %v886 = vunpack.c.h.b16 %v278
        %v887 = vunpack.c.l.b16 %v279
        %v888 = vunpack.c.h.b16 %v279
        %v889 = vunpack.c.l.b16 %v280
        %v890 = vunpack.c.h.b16 %v280
        %v891 = vunpack.c.l.b16 %v281
        %v892 = vunpack.c.h.b16 %v281
        %v893 = vunpack.c.l.b16 %v282
        %v894 = vunpack.c.h.b16 %v282
        %v895 = vunpack.c.l.b16 %v283
        %v896 = vunpack.c.h.b16 %v283
        %v897 = vunpack.c.l.b16 %v284
        %v898 = vunpack.c.h.b16 %v284
        %v899 = vunpack.c.l.b16 %v285
        %v900 = vunpack.c.h.b16 %v285
        %v901 = vunpack.c.l.b16 %v286
        %v902 = vunpack.c.h.b16 %v286
        %v903 = vunpack.c.l.b16 %v287
        %v904 = vunpack.c.h.b16 %v287
        %v905 = vunpack.c.l.b16 %v288
        %v906 = vunpack.c.h.b16 %v288
        %v907 = vunpack.c.l.b16 %v289
        %v908 = vunpack.c.h.b16 %v289
        %v909 = vunpack.c.l.b16 %v290
        %v910 = vunpack.c.h.b16 %v290
        %v911 = vunpack.c.l.b16 %v291
        %v912 = vunpack.c.h.b16 %v291
        %v913 = vunpack.c.l.b16 %v292
        %v914 = vunpack.c.h.b16 %v292
        %v915 = vunpack.c.l.b16 %v293
        %v916 = vunpack.c.h.b16 %v293
        %v917 = vunpack.c.l.b16 %v294
        %v918 = vunpack.c.h.b16 %v294
        %v919 = vunpack.c.l.b16 %v295
        %v920 = vunpack.c.h.b16 %v295
        %v921 = vunpack.c.l.b16 %v296
        %v922 = vunpack.c.h.b16 %v296
        %v923 = vunpack.c.l.b16 %v297
        %v924 = vunpack.c.h.b16 %v297
        %v925 = vunpack.c.l.b16 %v298
        %v926 = vunpack.c.h.b16 %v298
        %v927 = vunpack.c.l.b16 %v299
        %v928 = vunpack.c.h.b16 %v299
        %v929 = vunpack.c.l.b16 %v300
        %v930 = vunpack.c.h.b16 %v300
        %v931 = vunpack.c.l.b16 %v301
        %v932 = vunpack.c.h.b16 %v301
        %v933 = vunpack.c.l.b16 %v302
        %v934 = vunpack.c.h.b16 %v302
        %v935 = vunpack.c.l.b16 %v303
        %v936 = vunpack.c.h.b16 %v303
        %v937 = vunpack.c.l.b16 %v304
        %v938 = vunpack.c.h.b16 %v304
        %v939 = vunpack.c.l.b16 %v305
        %v940 = vunpack.c.h.b16 %v305
        %v941 = vunpack.c.l.b16 %v306
        %v942 = vunpack.c.h.b16 %v306
        %v943 = vunpack.c.l.b16 %v307
        %v944 = vunpack.c.h.b16 %v307
        %v945 = vunpack.c.l.b16 %v308
        %v946 = vunpack.c.h.b16 %v308
        %v947 = vunpack.c.l.b16 %v309
        %v948 = vunpack.c.h.b16 %v309
        %v949 = vunpack.c.l.b16 %v310
        %v950 = vunpack.c.h.b16 %v310
        %v951 = vunpack.c.l.b16 %v311
        %v952 = vunpack.c.h.b16 %v311
        %v953 = vunpack.c.l.b16 %v312
        %v954 = vunpack.c.h.b16 %v312
        %v955 = vunpack.c.l.b16 %v313
        %v956 = vunpack.c.h.b16 %v313
        %v957 = vunpack.c.l.b16 %v314
        %v958 = vunpack.c.h.b16 %v314
        %v959 = vunpack.c.l.b16 %v315
        %v960 = vunpack.c.h.b16 %v315
        %v961 = vunpack.c.l.b16 %v316
        %v962 = vunpack.c.h.b16 %v316
        %v963 = vunpack.c.l.b16 %v317
        %v964 = vunpack.c.h.b16 %v317
        %v965 = vunpack.c.l.b16 %v318
        %v966 = vunpack.c.h.b16 %v318
        %v967 = vunpack.c.l.b16 %v319
        %v968 = vunpack.c.h.b16 %v319
        %v969 = vunpack.c.l.b16 %v320
        %v970 = vunpack.c.h.b16 %v320
        %v971 = vunpack.c.l.b16 %v321
        %v972 = vunpack.c.h.b16 %v321
        %v973 = vunpack.c.l.b16 %v322
        %v974 = vunpack.c.h.b16 %v322
        %v975 = vunpack.c.l.b16 %v323
        %v976 = vunpack.c.h.b16 %v323
        %v977 = vunpack.c.l.b16 %v324
        %v978 = vunpack.c.h.b16 %v324
        %v979 = vunpack.c.l.b16 %v325
        %v980 = vunpack.c.h.b16 %v325
        %v981 = vunpack.c.l.b16 %v326
        %v982 = vunpack.c.h.b16 %v326
        %v983 = vunpack.c.l.b16 %v327
        %v984 = vunpack.c.h.b16 %v327
        %v985 = vunpack.c.l.b16 %v328
        %v986 = vunpack.c.h.b16 %v328
        %v987 = vunpack.c.l.b16 %v329
        %v988 = vunpack.c.h.b16 %v329
        %v989 = vunpack.c.l.b16 %v330
        %v990 = vunpack.c.h.b16 %v330
        %v991 = vunpack.c.l.b16 %v331
        %v992 = vunpack.c.h.b16 %v331
        %v993 = vunpack.c.l.b16 %v332
        %v994 = vunpack.c.h.b16 %v332
        %v995 = vunpack.c.l.b16 %v333
        %v996 = vunpack.c.h.b16 %v333
        %v997 = vunpack.c.l.b16 %v334
        %v998 = vunpack.c.h.b16 %v334
        %v999 = vunpack.c.l.b16 %v335
        %v1000 = vunpack.c.h.b16 %v335
        %v1001 = vunpack.c.l.b16 %v336
        %v1002 = vunpack.c.h.b16 %v336
        %v1003 = vunpack.c.l.b16 %v337
        %v1004 = vunpack.c.h.b16 %v337
        %v1005 = vunpack.c.l.b16 %v338
        %v1006 = vunpack.c.h.b16 %v338
        %v1007 = vunpack.c.l.b16 %v339
        %v1008 = vunpack.c.h.b16 %v339
        %v1009 = vunpack.c.l.b16 %v340
        %v1010 = vunpack.c.h.b16 %v340
        %v1011 = vunpack.c.l.b16 %v341
        %v1012 = vunpack.c.h.b16 %v341
        %v1013 = vunpack.c.l.b16 %v342
        %v1014 = vunpack.c.h.b16 %v342
        %v1015 = vunpack.c.l.b16 %v343
        %v1016 = vunpack.c.h.b16 %v343
        %v1017 = vunpack.c.l.b16 %v344
        %v1018 = vunpack.c.h.b16 %v344
        %v1019 = vunpack.c.l.b16 %v345
        %v1020 = vunpack.c.h.b16 %v345
        %v1021 = vunpack.c.l.b16 %v346
        %v1022 = vunpack.c.h.b16 %v346
        %v1023 = vunpack.c.l.b16 %v347
        %v1024 = vunpack.c.h.b16 %v347
        %v1025 = vunpack.c.l.b16 %v348
        %v1026 = vunpack.c.h.b16 %v348
        %v1027 = vunpack.c.l.b16 %v349
        %v1028 = vunpack.c.h.b16 %v349
        %v1029 = vunpack.c.l.b16 %v350
        %v1030 = vunpack.c.h.b16 %v350
        %v1031 = vunpack.c.l.b16 %v351
        %v1032 = vunpack.c.h.b16 %v351
        %v1033 = vunpack.c.l.b16 %v352
        %v1034 = vunpack.c.h.b16 %v352
        %v1035 = vunpack.c.l.b16 %v353
        %v1036 = vunpack.c.h.b16 %v353
        %v1037 = vunpack.c.l.b16 %v354
        %v1038 = vunpack.c.h.b16 %v354
        %v1039 = vunpack.c.l.b16 %v355
        %v1040 = vunpack.c.h.b16 %v355
        %v1041 = vunpack.c.l.b16 %v356
        %v1042 = vunpack.c.h.b16 %v356
        %v1043 = vunpack.c.l.b16 %v357
        %v1044 = vunpack.c.h.b16 %v357
        %v1045 = vunpack.c.l.b16 %v358
        %v1046 = vunpack.c.h.b16 %v358
        %v1047 = vunpack.c.l.b16 %v359
        %v1048 = vunpack.c.h.b16 %v359
        %v1049 = vunpack.c.l.b16 %v360
        %v1050 = vunpack.c.h.b16 %v360
        %v1051 = vunpack.c.l.b16 %v361
        %v1052 = vunpack.c.h.b16 %v361
        %v1053 = vunpack.c.l.b16 %v362
        %v1054 = vunpack.c.h.b16 %v362
        %v1055 = vunpack.c.l.b16 %v363
        %v1056 = vunpack.c.h.b16 %v363
        %v1057 = vunpack.c.l.b16 %v364
        %v1058 = vunpack.c.h.b16 %v364
        %v1059 = vunpack.c.l.b16 %v365
        %v1060 = vunpack.c.h.b16 %v365
        %v1061 = vunpack.c.l.b16 %v366
        %v1062 = vunpack.c.h.b16 %v366
        %v1063 = vunpack.c.l.b16 %v367
        %v1064 = vunpack.c.h.b16 %v367
        %v1065 = vunpack.c.l.b16 %v368
        %v1066 = vunpack.c.h.b16 %v368
        %v1067 = vunpack.c.l.b16 %v369
        %v1068 = vunpack.c.h.b16 %v369
        %v1069 = vunpack.c.l.b16 %v370
        %v1070 = vunpack.c.h.b16 %v370
        %v1071 = vunpack.c.l.b16 %v371
        %v1072 = vunpack.c.h.b16 %v371
        %v1073 = vunpack.c.l.b16 %v372
        %v1074 = vunpack.c.h.b16 %v372
        %v1075 = vunpack.c.l.b16 %v373
        %v1076 = vunpack.c.h.b16 %v373
        %v1077 = vunpack.c.l.b16 %v374
        %v1078 = vunpack.c.h.b16 %v374
        %v1079 = vunpack.c.l.b16 %v375
        %v1080 = vunpack.c.h.b16 %v375
        %v1081 = vunpack.c.l.b16 %v376
        %v1082 = vunpack.c.h.b16 %v376
        %v1083 = vunpack.c.l.b16 %v377
        %v1084 = vunpack.c.h.b16 %v377
        %v1085 = vunpack.c.l.b16 %v378
        %v1086 = vunpack.c.h.b16 %v378
        %v1087 = vunpack.c.l.b16 %v379
        %v1088 = vunpack.c.h.b16 %v379
        %v1089 = vunpack.c.l.b16 %v380
        %v1090 = vunpack.c.h.b16 %v380
        %v1091 = vunpack.c.l.b16 %v381
        %v1092 = vunpack.c.h.b16 %v381
        %v1093 = vunpack.c.l.b16 %v382
        %v1094 = vunpack.c.h.b16 %v382
        %v1095 = vunpack.c.l.b16 %v383
        %v1096 = vunpack.c.h.b16 %v383
        %v1097 = vunpack.c.l.b16 %v384
        %v1098 = vunpack.c.h.b16 %v384
        %v1099 = vunpack.c.l.b16 %v385
        %v1100 = vunpack.c.h.b16 %v385
        %v1101 = vunpack.c.l.b16 %v386
        %v1102 = vunpack.c.h.b16 %v386
        %v1103 = vunpack.c.l.b16 %v387
        %v1104 = vunpack.c.h.b16 %v387
        %v1105 = vunpack.c.l.b16 %v388
        %v1106 = vunpack.c.h.b16 %v388
        %v1107 = vunpack.c.l.b16 %v389
        %v1108 = vunpack.c.h.b16 %v389
        %v1109 = vunpack.c.l.b16 %v390
        %v1110 = vunpack.c.h.b16 %v390
        %v1111 = vunpack.c.l.b16 %v391
        %v1112 = vunpack.c.h.b16 %v391
        %v1113 = vunpack.c.l.b16 %v392
        %v1114 = vunpack.c.h.b16 %v392
        %v1115 = vunpack.c.l.b16 %v393
        %v1116 = vunpack.c.h.b16 %v393
        %v1117 = vunpack.c.l.b16 %v394
        %v1118 = vunpack.c.h.b16 %v394
        %v1119 = vunpack.c.l.b16 %v395
        %v1120 = vunpack.c.h.b16 %v395
        %v1121 = vunpack.c.l.b16 %v396
        %v1122 = vunpack.c.h.b16 %v396
        %v1123 = vunpack.c.l.b16 %v397
        %v1124 = vunpack.c.h.b16 %v397
        %v1125 = vunpack.c.l.b16 %v398
        %v1126 = vunpack.c.h.b16 %v398
        %v1127 = vunpack.c.l.b16 %v399
        %v1128 = vunpack.c.h.b16 %v399
        %v1129 = vunpack.c.l.b16 %v400
        %v1130 = vunpack.c.h.b16 %v400
        %v1131 = vunpack.c.l.b16 %v401
        %v1132 = vunpack.c.h.b16 %v401
        %v1133 = vunpack.c.l.b16 %v402
        %v1134 = vunpack.c.h.b16 %v402
        %v1135 = vunpack.c.l.b16 %v403
        %v1136 = vunpack.c.h.b16 %v403
        %v1137 = vunpack.c.l.b16 %v404
        %v1138 = vunpack.c.h.b16 %v404
        %v1139 = vunpack.c.l.b16 %v405
        %v1140 = vunpack.c.h.b16 %v405
        %v1141 = vunpack.c.l.b16 %v406
        %v1142 = vunpack.c.h.b16 %v406
        %v1143 = vunpack.c.l.b16 %v407
        %v1144 = vunpack.c.h.b16 %v407
        %v1145 = vunpack.c.l.b16 %v408
        %v1146 = vunpack.c.h.b16 %v408
        %v1147 = vunpack.c.l.b16 %v409
        %v1148 = vunpack.c.h.b16 %v409
        %v1149 = vunpack.c.l.b16 %v410
        %v1150 = vunpack.c.h.b16 %v410
        %v1151 = vunpack.c.l.b16 %v411
        %v1152 = vunpack.c.h.b16 %v411
        %v1153 = vunpack.c.l.b16 %v412
        %v1154 = vunpack.c.h.b16 %v412
        %v1155 = vunpack.c.l.b16 %v413
        %v1156 = vunpack.c.h.b16 %v413
        %v1157 = vunpack.c.l.b16 %v414
        %v1158 = vunpack.c.h.b16 %v414
        %v1159 = vunpack.c.l.b16 %v415
        %v1160 = vunpack.c.h.b16 %v415
        %v1161 = vunpack.c.l.b16 %v416
        %v1162 = vunpack.c.h.b16 %v416
        %v1163 = vunpack.c.l.b16 %v417
        %v1164 = vunpack.c.h.b16 %v417
        %v1165 = vunpack.c.l.b16 %v418
        %v1166 = vunpack.c.h.b16 %v418
        %v1167 = vunpack.c.l.b16 %v419
        %v1168 = vunpack.c.h.b16 %v419
        %v1169 = vunpack.c.l.b16 %v420
        %v1170 = vunpack.c.h.b16 %v420
        %v1171 = vunpack.c.l.b16 %v421
        %v1172 = vunpack.c.h.b16 %v421
        %v1173 = vunpack.c.l.b16 %v422
        %v1174 = vunpack.c.h.b16 %v422
        %v1175 = vunpack.c.l.b16 %v423
        %v1176 = vunpack.c.h.b16 %v423
        %v1177 = vunpack.c.l.b16 %v424
        %v1178 = vunpack.c.h.b16 %v424
        %v1179 = vunpack.c.l.b16 %v425
        %v1180 = vunpack.c.h.b16 %v425
        %v1181 = vunpack.c.l.b16 %v426
        %v1182 = vunpack.c.h.b16 %v426
        %v1183 = vunpack.c.l.b16 %v427
        %v1184 = vunpack.c.h.b16 %v427
        %v1185 = vunpack.c.l.b16 %v428
        %v1186 = vunpack.c.h.b16 %v428
        %v1187 = vunpack.c.l.b16 %v429
        %v1188 = vunpack.c.h.b16 %v429
        %v1189 = vunpack.c.l.b16 %v430
        %v1190 = vunpack.c.h.b16 %v430
        %v1191 = vunpack.c.l.b16 %v431
        %v1192 = vunpack.c.h.b16 %v431
        %v1193 = vunpack.c.l.b16 %v432
        %v1194 = vunpack.c.h.b16 %v432
        %v1195 = vunpack.c.l.b16 %v433
        %v1196 = vunpack.c.h.b16 %v433
        %v1197 = vunpack.c.l.b16 %v434
        %v1198 = vunpack.c.h.b16 %v434
        %v1199 = vunpack.c.l.b16 %v435
        %v1200 = vunpack.c.h.b16 %v435
        %v1201 = vunpack.c.l.b16 %v436
        %v1202 = vunpack.c.h.b16 %v436
        %v1203 = vunpack.c.l.b16 %v437
        %v1204 = vunpack.c.h.b16 %v437
        %v1205 = vunpack.c.l.b16 %v438
        %v1206 = vunpack.c.h.b16 %v438
        %v1207 = vunpack.c.l.b16 %v439
        %v1208 = vunpack.c.h.b16 %v439
        %v1209 = vunpack.c.l.b16 %v440
        %v1210 = vunpack.c.h.b16 %v440
        %v1211 = vunpack.c.l.b16 %v441
        %v1212 = vunpack.c.h.b16 %v441
        %v1213 = vunpack.c.l.b16 %v442
        %v1214 = vunpack.c.h.b16 %v442
        %v1215 = vunpack.c.l.b16 %v443
        %v1216 = vunpack.c.h.b16 %v443
        %v1217 = vunpack.c.l.b16 %v444
        %v1218 = vunpack.c.h.b16 %v444
        %v1219 = vunpack.c.l.b16 %v445
        %v1220 = vunpack.c.h.b16 %v445
        %v1221 = vunpack.c.l.b16 %v446
        %v1222 = vunpack.c.h.b16 %v446
        %v1223 = vunpack.c.l.b16 %v447
        %v1224 = vunpack.c.h.b16 %v447
        %v1225 = vunpack.c.l.b16 %v448
        %v1226 = vunpack.c.h.b16 %v448
        %v1227 = vunpack.c.l.b16 %v449
        %v1228 = vunpack.c.h.b16 %v449
        %v1229 = vunpack.c.l.b16 %v450
        %v1230 = vunpack.c.h.b16 %v450
        %v1231 = vunpack.c.l.b16 %v451
        %v1232 = vunpack.c.h.b16 %v451
        %v1233 = vunpack.c.l.b16 %v452
        %v1234 = vunpack.c.h.b16 %v452
        %v1235 = vunpack.c.l.b16 %v453
        %v1236 = vunpack.c.h.b16 %v453
        %v1237 = vunpack.c.l.b16 %v454
        %v1238 = vunpack.c.h.b16 %v454
        %v1239 = vunpack.c.l.b16 %v455
        %v1240 = vunpack.c.h.b16 %v455
        %v1241 = vunpack.c.l.b16 %v456
        %v1242 = vunpack.c.h.b16 %v456
        %v1243 = vunpack.c.l.b16 %v457
        %v1244 = vunpack.c.h.b16 %v457
        %v1245 = vunpack.c.l.b16 %v458
        %v1246 = vunpack.c.h.b16 %v458
        %v1247 = vunpack.c.l.b16 %v459
        %v1248 = vunpack.c.h.b16 %v459
        %v1249 = vunpack.c.l.b16 %v460
        %v1250 = vunpack.c.h.b16 %v460
        %v1251 = vunpack.c.l.b16 %v461
        %v1252 = vunpack.c.h.b16 %v461
        %v1253 = vunpack.c.l.b16 %v462
        %v1254 = vunpack.c.h.b16 %v462
        %v1255 = vunpack.c.l.b16 %v463
        %v1256 = vunpack.c.h.b16 %v463
        %v1257 = vunpack.c.l.b16 %v464
        %v1258 = vunpack.c.h.b16 %v464
        %v1259 = vunpack.c.l.b16 %v465
        %v1260 = vunpack.c.h.b16 %v465
        %v1261 = vunpack.c.l.b16 %v466
        %v1262 = vunpack.c.h.b16 %v466
        %v1263 = vunpack.c.l.b16 %v467
        %v1264 = vunpack.c.h.b16 %v467
        %v1265 = vunpack.c.l.b16 %v468
        %v1266 = vunpack.c.h.b16 %v468
        %v1267 = vunpack.c.l.b16 %v469
        %v1268 = vunpack.c.h.b16 %v469
        %v1269 = vunpack.c.l.b16 %v470
        %v1270 = vunpack.c.h.b16 %v470
        %v1271 = vunpack.c.l.b16 %v471
        %v1272 = vunpack.c.h.b16 %v471
        %v1273 = vunpack.c.l.b16 %v472
        %v1274 = vunpack.c.h.b16 %v472
        %v1275 = vunpack.c.l.b16 %v473
        %v1276 = vunpack.c.h.b16 %v473
        %v1277 = vunpack.c.l.b16 %v474
        %v1278 = vunpack.c.h.b16 %v474
        %v1279 = vunpack.c.l.b16 %v475
        %v1280 = vunpack.c.h.b16 %v475
        %v1281 = vunpack.c.l.b16 %v476
        %v1282 = vunpack.c.h.b16 %v476
        %v1283 = vunpack.c.l.b16 %v477
        %v1284 = vunpack.c.h.b16 %v477
        %v1285 = vunpack.c.l.b16 %v478
        %v1286 = vunpack.c.h.b16 %v478
        %v1287 = vunpack.c.l.b16 %v479
        %v1288 = vunpack.c.h.b16 %v479
        %v1289 = vunpack.c.l.b16 %v480
        %v1290 = vunpack.c.h.b16 %v480
        %v1291 = vunpack.c.l.b16 %v481
        %v1292 = vunpack.c.h.b16 %v481
        %v1293 = vunpack.c.l.b16 %v482
        %v1294 = vunpack.c.h.b16 %v482
        %v1295 = vunpack.c.l.b16 %v483
        %v1296 = vunpack.c.h.b16 %v483
        %v1297 = vunpack.c.l.b16 %v484
        %v1298 = vunpack.c.h.b16 %v484
        %v1299 = vunpack.c.l.b16 %v485
        %v1300 = vunpack.c.h.b16 %v485
        %v1301 = vunpack.c.l.b16 %v486
        %v1302 = vunpack.c.h.b16 %v486
        %v1303 = vunpack.c.l.b16 %v487
        %v1304 = vunpack.c.h.b16 %v487
        %v1305 = vunpack.c.l.b16 %v488
        %v1306 = vunpack.c.h.b16 %v488
        %v1307 = vunpack.c.l.b16 %v489
        %v1308 = vunpack.c.h.b16 %v489
        %v1309 = vunpack.c.l.b16 %v490
        %v1310 = vunpack.c.h.b16 %v490
        %v1311 = vunpack.c.l.b16 %v491
        %v1312 = vunpack.c.h.b16 %v491
        %v1313 = vunpack.c.l.b16 %v492
        %v1314 = vunpack.c.h.b16 %v492
        %v1315 = vunpack.c.l.b16 %v493
        %v1316 = vunpack.c.h.b16 %v493
        %v1317 = vunpack.c.l.b16 %v494
        %v1318 = vunpack.c.h.b16 %v494
        %v1319 = vunpack.c.l.b16 %v495
        %v1320 = vunpack.c.h.b16 %v495
        %v1321 = vunpack.c.l.b16 %v496
        %v1322 = vunpack.c.h.b16 %v496
        %v1323 = vunpack.c.l.b16 %v497
        %v1324 = vunpack.c.h.b16 %v497
        %v1325 = vunpack.c.l.b16 %v498
        %v1326 = vunpack.c.h.b16 %v498
        %v1327 = vunpack.c.l.b16 %v499
        %v1328 = vunpack.c.h.b16 %v499
        %v1329 = vunpack.c.l.b16 %v500
        %v1330 = vunpack.c.h.b16 %v500
        %v1331 = vunpack.c.l.b16 %v501
        %v1332 = vunpack.c.h.b16 %v501
        %v1333 = vunpack.c.l.b16 %v502
        %v1334 = vunpack.c.h.b16 %v502
        %v1335 = vunpack.c.l.b16 %v503
        %v1336 = vunpack.c.h.b16 %v503
        %v1337 = vunpack.c.l.b16 %v504
        %v1338 = vunpack.c.h.b16 %v504
        %v1339 = vunpack.c.l.b16 %v505
        %v1340 = vunpack.c.h.b16 %v505
        %v1341 = vunpack.c.l.b16 %v506
        %v1342 = vunpack.c.h.b16 %v506
        %v1343 = vunpack.c.l.b16 %v507
        %v1344 = vunpack.c.h.b16 %v507
        %v1345 = vunpack.c.l.b16 %v508
        %v1346 = vunpack.c.h.b16 %v508
        %v1347 = vunpack.c.l.b16 %v509
        %v1348 = vunpack.c.h.b16 %v509
        %v1349 = vunpack.c.l.b16 %v510
        %v1350 = vunpack.c.h.b16 %v510
        %v1351 = vunpack.c.l.b16 %v511
        %v1352 = vunpack.c.h.b16 %v511
        %v1353 = vunpack.c.l.b16 %v512
        %v1354 = vunpack.c.h.b16 %v512
        %v1355 = vunpack.c.l.b16 %v513
        %v1356 = vunpack.c.h.b16 %v513
        %v1357 = vunpack.c.l.b16 %v514
        %v1358 = vunpack.c.h.b16 %v514
        %v1359 = vunpack.c.l.b16 %v515
        %v1360 = vunpack.c.h.b16 %v515
        %v1361 = vunpack.c.l.b16 %v516
        %v1362 = vunpack.c.h.b16 %v516
        %v1363 = vunpack.c.l.b16 %v517
        %v1364 = vunpack.c.h.b16 %v517
        %v1365 = vunpack.c.l.b16 %v518
        %v1366 = vunpack.c.h.b16 %v518
        %v1367 = vpack.c.b16 %v859, %v855
        %v1368 = vpack.c.b16 %v860, %v856
        %v1369 = vpack.c.b16 %v861, %v857
        %v1370 = vpack.c.b16 %v862, %v858
        %v1371 = vpack.c.b16 %v867, %v863
        %v1372 = vpack.c.b16 %v868, %v864
        %v1373 = vpack.c.b16 %v869, %v865
        %v1374 = vpack.c.b16 %v870, %v866
        %v1375 = vpack.c.b16 %v875, %v871
        %v1376 = vpack.c.b16 %v876, %v872
        %v1377 = vpack.c.b16 %v877, %v873
        %v1378 = vpack.c.b16 %v878, %v874
        %v1379 = vpack.c.b16 %v883, %v879
        %v1380 = vpack.c.b16 %v884, %v880
        %v1381 = vpack.c.b16 %v885, %v881
        %v1382 = vpack.c.b16 %v886, %v882
        %v1383 = vpack.c.b16 %v891, %v887
        %v1384 = vpack.c.b16 %v892, %v888
        %v1385 = vpack.c.b16 %v893, %v889
        %v1386 = vpack.c.b16 %v894, %v890
        %v1387 = vpack.c.b16 %v899, %v895
        %v1388 = vpack.c.b16 %v900, %v896
        %v1389 = vpack.c.b16 %v901, %v897
        %v1390 = vpack.c.b16 %v902, %v898
        %v1391 = vpack.c.b16 %v907, %v903
        %v1392 = vpack.c.b16 %v908, %v904
        %v1393 = vpack.c.b16 %v909, %v905
        %v1394 = vpack.c.b16 %v910, %v906
        %v1395 = vpack.c.b16 %v915, %v911
        %v1396 = vpack.c.b16 %v916, %v912
        %v1397 = vpack.c.b16 %v917, %v913
        %v1398 = vpack.c.b16 %v918, %v914
        %v1399 = vpack.c.b16 %v923, %v919
        %v1400 = vpack.c.b16 %v924, %v920
        %v1401 = vpack.c.b16 %v925, %v921
        %v1402 = vpack.c.b16 %v926, %v922
        %v1403 = vpack.c.b16 %v931, %v927
        %v1404 = vpack.c.b16 %v932, %v928
        %v1405 = vpack.c.b16 %v933, %v929
        %v1406 = vpack.c.b16 %v934, %v930
        %v1407 = vpack.c.b16 %v939, %v935
        %v1408 = vpack.c.b16 %v940, %v936
        %v1409 = vpack.c.b16 %v941, %v937
        %v1410 = vpack.c.b16 %v942, %v938
        %v1411 = vpack.c.b16 %v947, %v943
        %v1412 = vpack.c.b16 %v948, %v944
        %v1413 = vpack.c.b16 %v949, %v945
        %v1414 = vpack.c.b16 %v950, %v946
        %v1415 = vpack.c.b16 %v955, %v951
        %v1416 = vpack.c.b16 %v956, %v952
        %v1417 = vpack.c.b16 %v957, %v953
        %v1418 = vpack.c.b16 %v958, %v954
        %v1419 = vpack.c.b16 %v963, %v959
        %v1420 = vpack.c.b16 %v964, %v960
        %v1421 = vpack.c.b16 %v965, %v961
        %v1422 = vpack.c.b16 %v966, %v962
        %v1423 = vpack.c.b16 %v971, %v967
        %v1424 = vpack.c.b16 %v972, %v968
        %v1425 = vpack.c.b16 %v973, %v969
        %v1426 = vpack.c.b16 %v974, %v970
        %v1427 = vpack.c.b16 %v979, %v975
        %v1428 = vpack.c.b16 %v980, %v976
        %v1429 = vpack.c.b16 %v981, %v977
        %v1430 = vpack.c.b16 %v982, %v978
        %v1431 = vpack.c.b16 %v987, %v983
        %v1432 = vpack.c.b16 %v988, %v984
        %v1433 = vpack.c.b16 %v989, %v985
        %v1434 = vpack.c.b16 %v990, %v986
        %v1435 = vpack.c.b16 %v995, %v991
        %v1436 = vpack.c.b16 %v996, %v992
        %v1437 = vpack.c.b16 %v997, %v993
        %v1438 = vpack.c.b16 %v998, %v994
        %v1439 = vpack.c.b16 %v1003, %v999
        %v1440 = vpack.c.b16 %v1004, %v1000
        %v1441 = vpack.c.b16 %v1005, %v1001
        %v1442 = vpack.c.b16 %v1006, %v1002
        %v1443 = vpack.c.b16 %v1011, %v1007
        %v1444 = vpack.c.b16 %v1012, %v1008
        %v1445 = vpack.c.b16 %v1013, %v1009
        %v1446 = vpack.c.b16 %v1014, %v1010
        %v1447 = vpack.c.b16 %v1019, %v1015
        %v1448 = vpack.c.b16 %v1020, %v1016
        %v1449 = vpack.c.b16 %v1021, %v1017
        %v1450 = vpack.c.b16 %v1022, %v1018
        %v1451 = vpack.c.b16 %v1027, %v1023
        %v1452 = vpack.c.b16 %v1028, %v1024
        %v1453 = vpack.c.b16 %v1029, %v1025
        %v1454 = vpack.c.b16 %v1030, %v1026
        %v1455 = vpack.c.b16 %v1035, %v1031
        %v1456 = vpack.c.b16 %v1036, %v1032
        %v1457 = vpack.c.b16 %v1037, %v1033
        %v1458 = vpack.c.b16 %v1038, %v1034
        %v1459 = vpack.c.b16 %v1043, %v1039
        %v1460 = vpack.c.b16 %v1044, %v1040
        %v1461 = vpack.c.b16 %v1045, %v1041
        %v1462 = vpack.c.b16 %v1046, %v1042
        %v1463 = vpack.c.b16 %v1051, %v1047
        %v1464 = vpack.c.b16 %v1052, %v1048
        %v1465 = vpack.c.b16 %v1053, %v1049
        %v1466 = vpack.c.b16 %v1054, %v1050
        %v1467 = vpack.c.b16 %v1059, %v1055
        %v1468 = vpack.c.b16 %v1060, %v1056
        %v1469 = vpack.c.b16 %v1061, %v1057
        %v1470 = vpack.c.b16 %v1062, %v1058
        %v1471 = vpack.c.b16 %v1067, %v1063
        %v1472 = vpack.c.b16 %v1068, %v1064
        %v1473 = vpack.c.b16 %v1069, %v1065
        %v1474 = vpack.c.b16 %v1070, %v1066
        %v1475 = vpack.c.b16 %v1075, %v1071
        %v1476 = vpack.c.b16 %v1076, %v1072
        %v1477 = vpack.c.b16 %v1077, %v1073
        %v1478 = vpack.c.b16 %v1078, %v1074
        %v1479 = vpack.c.b16 %v1083, %v1079
        %v1480 = vpack.c.b16 %v1084, %v1080
        %v1481 = vpack.c.b16 %v1085, %v1081
        %v1482 = vpack.c.b16 %v1086, %v1082
        %v1483 = vpack.c.b16 %v1091, %v1087
        %v1484 = vpack.c.b16 %v1092, %v1088
        %v1485 = vpack.c.b16 %v1093, %v1089
        %v1486 = vpack.c.b16 %v1094, %v1090
        %v1487 = vpack.c.b16 %v1099, %v1095
        %v1488 = vpack.c.b16 %v1100, %v1096
        %v1489 = vpack.c.b16 %v1101, %v1097
        %v1490 = vpack.c.b16 %v1102, %v1098
        %v1491 = vpack.c.b16 %v1107, %v1103
        %v1492 = vpack.c.b16 %v1108, %v1104
        %v1493 = vpack.c.b16 %v1109, %v1105
        %v1494 = vpack.c.b16 %v1110, %v1106
        %v1495 = vpack.c.b16 %v1115, %v1111
        %v1496 = vpack.c.b16 %v1116, %v1112
        %v1497 = vpack.c.b16 %v1117, %v1113
        %v1498 = vpack.c.b16 %v1118, %v1114
        %v1499 = vpack.c.b16 %v1123, %v1119
        %v1500 = vpack.c.b16 %v1124, %v1120
        %v1501 = vpack.c.b16 %v1125, %v1121
        %v1502 = vpack.c.b16 %v1126, %v1122
        %v1503 = vpack.c.b16 %v1131, %v1127
        %v1504 = vpack.c.b16 %v1132, %v1128
        %v1505 = vpack.c.b16 %v1133, %v1129
        %v1506 = vpack.c.b16 %v1134, %v1130
        %v1507 = vpack.c.b16 %v1139, %v1135
        %v1508 = vpack.c.b16 %v1140, %v1136
        %v1509 = vpack.c.b16 %v1141, %v1137
        %v1510 = vpack.c.b16 %v1142, %v1138
        %v1511 = vpack.c.b16 %v1147, %v1143
        %v1512 = vpack.c.b16 %v1148, %v1144
        %v1513 = vpack.c.b16 %v1149, %v1145
        %v1514 = vpack.c.b16 %v1150, %v1146
        %v1515 = vpack.c.b16 %v1155, %v1151
        %v1516 = vpack.c.b16 %v1156, %v1152
        %v1517 = vpack.c.b16 %v1157, %v1153
        %v1518 = vpack.c.b16 %v1158, %v1154
        %v1519 = vpack.c.b16 %v1163, %v1159
        %v1520 = vpack.c.b16 %v1164, %v1160
        %v1521 = vpack.c.b16 %v1165, %v1161
        %v1522 = vpack.c.b16 %v1166, %v1162
        %v1523 = vpack.c.b16 %v1171, %v1167
        %v1524 = vpack.c.b16 %v1172, %v1168
        %v1525 = vpack.c.b16 %v1173, %v1169
        %v1526 = vpack.c.b16 %v1174, %v1170
        %v1527 = vpack.c.b16 %v1179, %v1175
        %v1528 = vpack.c.b16 %v1180, %v1176
        %v1529 = vpack.c.b16 %v1181, %v1177
        %v1530 = vpack.c.b16 %v1182, %v1178
        %v1531 = vpack.c.b16 %v1187, %v1183
        %v1532 = vpack.c.b16 %v1188, %v1184
        %v1533 = vpack.c.b16 %v1189, %v1185
        %v1534 = vpack.c.b16 %v1190, %v1186
        %v1535 = vpack.c.b16 %v1195, %v1191
        %v1536 = vpack.c.b16 %v1196, %v1192
        %v1537 = vpack.c.b16 %v1197, %v1193
        %v1538 = vpack.c.b16 %v1198, %v1194
        %v1539 = vpack.c.b16 %v1203, %v1199
        %v1540 = vpack.c.b16 %v1204, %v1200
        %v1541 = vpack.c.b16 %v1205, %v1201
        %v1542 = vpack.c.b16 %v1206, %v1202
        %v1543 = vpack.c.b16 %v1211, %v1207
        %v1544 = vpack.c.b16 %v1212, %v1208
        %v1545 = vpack.c.b16 %v1213, %v1209
        %v1546 = vpack.c.b16 %v1214, %v1210
        %v1547 = vpack.c.b16 %v1219, %v1215
        %v1548 = vpack.c.b16 %v1220, %v1216
        %v1549 = vpack.c.b16 %v1221, %v1217
        %v1550 = vpack.c.b16 %v1222, %v1218
        %v1551 = vpack.c.b16 %v1227, %v1223
        %v1552 = vpack.c.b16 %v1228, %v1224
        %v1553 = vpack.c.b16 %v1229, %v1225
        %v1554 = vpack.c.b16 %v1230, %v1226
        %v1555 = vpack.c.b16 %v1235, %v1231
        %v1556 = vpack.c.b16 %v1236, %v1232
        %v1557 = vpack.c.b16 %v1237, %v1233
        %v1558 = vpack.c.b16 %v1238, %v1234
        %v1559 = vpack.c.b16 %v1243, %v1239
        %v1560 = vpack.c.b16 %v1244, %v1240
        %v1561 = vpack.c.b16 %v1245, %v1241
        %v1562 = vpack.c.b16 %v1246, %v1242
        %v1563 = vpack.c.b16 %v1251, %v1247
        %v1564 = vpack.c.b16 %v1252, %v1248
        %v1565 = vpack.c.b16 %v1253, %v1249
        %v1566 = vpack.c.b16 %v1254, %v1250
        %v1567 = vpack.c.b16 %v1259, %v1255
        %v1568 = vpack.c.b16 %v1260, %v1256
        %v1569 = vpack.c.b16 %v1261, %v1257
        %v1570 = vpack.c.b16 %v1262, %v1258
        %v1571 = vpack.c.b16 %v1267, %v1263
        %v1572 = vpack.c.b16 %v1268, %v1264
        %v1573 = vpack.c.b16 %v1269, %v1265
        %v1574 = vpack.c.b16 %v1270, %v1266
        %v1575 = vpack.c.b16 %v1275, %v1271
        %v1576 = vpack.c.b16 %v1276, %v1272
        %v1577 = vpack.c.b16 %v1277, %v1273
        %v1578 = vpack.c.b16 %v1278, %v1274
        %v1579 = vpack.c.b16 %v1283, %v1279
        %v1580 = vpack.c.b16 %v1284, %v1280
        %v1581 = vpack.c.b16 %v1285, %v1281
        %v1582 = vpack.c.b16 %v1286, %v1282
        %v1583 = vpack.c.b16 %v1291, %v1287
        %v1584 = vpack.c.b16 %v1292, %v1288
        %v1585 = vpack.c.b16 %v1293, %v1289
        %v1586 = vpack.c.b16 %v1294, %v1290
        %v1587 = vpack.c.b16 %v1299, %v1295
        %v1588 = vpack.c.b16 %v1300, %v1296
        %v1589 = vpack.c.b16 %v1301, %v1297
        %v1590 = vpack.c.b16 %v1302, %v1298
        %v1591 = vpack.c.b16 %v1307, %v1303
        %v1592 = vpack.c.b16 %v1308, %v1304
        %v1593 = vpack.c.b16 %v1309, %v1305
        %v1594 = vpack.c.b16 %v1310, %v1306
        %v1595 = vpack.c.b16 %v1315, %v1311
        %v1596 = vpack.c.b16 %v1316, %v1312
        %v1597 = vpack.c.b16 %v1317, %v1313
        %v1598 = vpack.c.b16 %v1318, %v1314
        %v1599 = vpack.c.b16 %v1323, %v1319
        %v1600 = vpack.c.b16 %v1324, %v1320
        %v1601 = vpack.c.b16 %v1325, %v1321
        %v1602 = vpack.c.b16 %v1326, %v1322
        %v1603 = vpack.c.b16 %v1331, %v1327
        %v1604 = vpack.c.b16 %v1332, %v1328
        %v1605 = vpack.c.b16 %v1333, %v1329
        %v1606 = vpack.c.b16 %v1334, %v1330
        %v1607 = vpack.c.b16 %v1339, %v1335
        %v1608 = vpack.c.b16 %v1340, %v1336
        %v1609 = vpack.c.b16 %v1341, %v1337
        %v1610 = vpack.c.b16 %v1342, %v1338
        %v1611 = vpack.c.b16 %v1347, %v1343
        %v1612 = vpack.c.b16 %v1348, %v1344
        %v1613 = vpack.c.b16 %v1349, %v1345
        %v1614 = vpack.c.b16 %v1350, %v1346
        %v1615 = vpack.c.b16 %v1355, %v1351
        %v1616 = vpack.c.b16 %v1356, %v1352
        %v1617 = vpack.c.b16 %v1357, %v1353
        %v1618 = vpack.c.b16 %v1358, %v1354
        %v1619 = vpack.c.b16 %v1363, %v1359
        %v1620 = vpack.c.b16 %v1364, %v1360
        %v1621 = vpack.c.b16 %v1365, %v1361
        %v1622 = vpack.c.b16 %v1366, %v1362
        %1879 = vmatprep.subr.bf16.mxu0 %v1396
        %1880 = vmatpush1.bf16.msra.mxu0 %v1395
        %1881 = vmatprep.subr.bf16.mxu0 %v1392
        %1882 = vmatpush1.bf16.msra.mxu0 %v1391
        %1883 = vmatprep.subr.bf16.mxu0 %v1388
        %1884 = vmatpush1.bf16.msra.mxu0 %v1387
        %1885 = vmatprep.subr.bf16.mxu0 %v1384
        %1886 = vmatpush1.bf16.msra.mxu0 %v1383
        %1887 = vmatprep.subr.bf16.mxu0 %v1380
        %1888 = vmatpush1.bf16.msra.mxu0 %v1379
        %1889 = vmatprep.subr.bf16.mxu0 %v1376
        %1890 = vmatpush1.bf16.msra.mxu0 %v1375
        %1891 = vmatprep.subr.bf16.mxu0 %v1372
        %1892 = vmatpush1.bf16.msra.mxu0 %v1371
        %1893 = vmatprep.subr.bf16.mxu0 %v1368
        %1894 = vmatpush1.bf16.msra.mxu0 %v1367
        %1895 = vmatprep.subr.bf16.mxu0 %v1428
        %1896 = vmatpush2.bf16.msra.mxu0 %v1427
        %1897 = vmatprep.subr.bf16.mxu0 %v1424
        %1898 = vmatpush2.bf16.msra.mxu0 %v1423
        %1899 = vmatprep.subr.bf16.mxu0 %v1420
        %1900 = vmatpush2.bf16.msra.mxu0 %v1419
        %1901 = vmatprep.subr.bf16.mxu0 %v1416
        %1902 = vmatpush2.bf16.msra.mxu0 %v1415
        %1903 = vmatprep.subr.bf16.mxu0 %v1412
        %1904 = vmatpush2.bf16.msra.mxu0 %v1411
        %1905 = vmatprep.subr.bf16.mxu0 %v1408
        %1906 = vmatpush2.bf16.msra.mxu0 %v1407
        %1907 = vmatprep.subr.bf16.mxu0 %v1404
        %1908 = vmatpush2.bf16.msra.mxu0 %v1403
        %1909 = vmatprep.subr.bf16.mxu0 %v1400
        %1910 = vmatpush2.bf16.msra.mxu0 %v1399
        %1911 = vmatprep.mubr.bf16.mxu0 %v579
        %1912 = vmatmul.mubr.bf16.gmra.mxu0 %v565
        %v1913 = vpop.f32.mrf.mxu0
        %v1914 = vadd.f32 %v524, %v1913
        %v1915 = vpop.f32.mrf.mxu0
        %v1916 = vadd.f32 %v528, %v1915
        %v1917 = vpop.f32.mrf.mxu0
        %v1918 = vpop.f32.mrf.mxu0
        %1919 = vdwg.mxu0
        %1920 = vmatprep.subr.bf16.mxu0 %v1460
        %1921 = vmatpush1.bf16.msra.mxu0 %v1459
        %1922 = vmatprep.subr.bf16.mxu0 %v1456
        %1923 = vmatpush1.bf16.msra.mxu0 %v1455
        %1924 = vmatprep.subr.bf16.mxu0 %v1452
        %1925 = vmatpush1.bf16.msra.mxu0 %v1451
        %1926 = vmatprep.subr.bf16.mxu0 %v1448
        %1927 = vmatpush1.bf16.msra.mxu0 %v1447
        %1928 = vmatprep.subr.bf16.mxu0 %v1444
        %1929 = vmatpush1.bf16.msra.mxu0 %v1443
        %1930 = vmatprep.subr.bf16.mxu0 %v1440
        %1931 = vmatpush1.bf16.msra.mxu0 %v1439
        %1932 = vmatprep.subr.bf16.mxu0 %v1436
        %1933 = vmatpush1.bf16.msra.mxu0 %v1435
        %1934 = vmatprep.subr.bf16.mxu0 %v1432
        %1935 = vmatpush1.bf16.msra.mxu0 %v1431
        %1936 = vmatprep.subr.bf16.mxu0 %v1492
        %1937 = vmatpush2.bf16.msra.mxu0 %v1491
        %1938 = vmatprep.subr.bf16.mxu0 %v1488
        %1939 = vmatpush2.bf16.msra.mxu0 %v1487
        %1940 = vmatprep.subr.bf16.mxu0 %v1484
        %1941 = vmatpush2.bf16.msra.mxu0 %v1483
        %1942 = vmatprep.subr.bf16.mxu0 %v1480
        %1943 = vmatpush2.bf16.msra.mxu0 %v1479
        %1944 = vmatprep.subr.bf16.mxu0 %v1476
        %1945 = vmatpush2.bf16.msra.mxu0 %v1475
        %1946 = vmatprep.subr.bf16.mxu0 %v1472
        %1947 = vmatpush2.bf16.msra.mxu0 %v1471
        %1948 = vmatprep.subr.bf16.mxu0 %v1468
        %1949 = vmatpush2.bf16.msra.mxu0 %v1467
        %1950 = vmatprep.subr.bf16.mxu0 %v1464
        %1951 = vmatpush2.bf16.msra.mxu0 %v1463
        %1952 = vmatprep.mubr.bf16.mxu0 %v589
        %1953 = vmatmul.mubr.bf16.gmra.mxu0 %v587
        %v1954 = vpop.f32.mrf.mxu0
        %v1955 = vadd.f32 %v1914, %v1954
        %v1956 = vpop.f32.mrf.mxu0
        %v1957 = vadd.f32 %v1916, %v1956
        %v1958 = vpop.f32.mrf.mxu0
        %v1959 = vpop.f32.mrf.mxu0
        %1960 = vdwg.mxu0
        %1961 = vmatprep.subr.bf16.mxu0 %v1524
        %1962 = vmatpush1.bf16.msra.mxu0 %v1523
        %1963 = vmatprep.subr.bf16.mxu0 %v1520
        %1964 = vmatpush1.bf16.msra.mxu0 %v1519
        %1965 = vmatprep.subr.bf16.mxu0 %v1516
        %1966 = vmatpush1.bf16.msra.mxu0 %v1515
        %1967 = vmatprep.subr.bf16.mxu0 %v1512
        %1968 = vmatpush1.bf16.msra.mxu0 %v1511
        %1969 = vmatprep.subr.bf16.mxu0 %v1508
        %1970 = vmatpush1.bf16.msra.mxu0 %v1507
        %1971 = vmatprep.subr.bf16.mxu0 %v1504
        %1972 = vmatpush1.bf16.msra.mxu0 %v1503
        %1973 = vmatprep.subr.bf16.mxu0 %v1500
        %1974 = vmatpush1.bf16.msra.mxu0 %v1499
        %1975 = vmatprep.subr.bf16.mxu0 %v1496
        %1976 = vmatpush1.bf16.msra.mxu0 %v1495
        %1977 = vmatprep.subr.bf16.mxu0 %v1556
        %1978 = vmatpush2.bf16.msra.mxu0 %v1555
        %1979 = vmatprep.subr.bf16.mxu0 %v1552
        %1980 = vmatpush2.bf16.msra.mxu0 %v1551
        %1981 = vmatprep.subr.bf16.mxu0 %v1548
        %1982 = vmatpush2.bf16.msra.mxu0 %v1547
        %1983 = vmatprep.subr.bf16.mxu0 %v1544
        %1984 = vmatpush2.bf16.msra.mxu0 %v1543
        %1985 = vmatprep.subr.bf16.mxu0 %v1540
        %1986 = vmatpush2.bf16.msra.mxu0 %v1539
        %1987 = vmatprep.subr.bf16.mxu0 %v1536
        %1988 = vmatpush2.bf16.msra.mxu0 %v1535
        %1989 = vmatprep.subr.bf16.mxu0 %v1532
        %1990 = vmatpush2.bf16.msra.mxu0 %v1531
        %1991 = vmatprep.subr.bf16.mxu0 %v1528
        %1992 = vmatpush2.bf16.msra.mxu0 %v1527
        %1993 = vmatprep.mubr.bf16.mxu0 %v586
        %1994 = vmatmul.mubr.bf16.gmra.mxu0 %v572
        %v1995 = vpop.f32.mrf.mxu0
        %v1996 = vadd.f32 %v1955, %v1995
        %v1997 = vpop.f32.mrf.mxu0
        %v1998 = vadd.f32 %v1957, %v1997
        %v1999 = vpop.f32.mrf.mxu0
        %v2000 = vpop.f32.mrf.mxu0
        %2001 = vdwg.mxu0
        %2002 = vmatprep.subr.bf16.mxu0 %v1588
        %2003 = vmatpush1.bf16.msra.mxu0 %v1587
        %2004 = vmatprep.subr.bf16.mxu0 %v1584
        %2005 = vmatpush1.bf16.msra.mxu0 %v1583
        %2006 = vmatprep.subr.bf16.mxu0 %v1580
        %2007 = vmatpush1.bf16.msra.mxu0 %v1579
        %2008 = vmatprep.subr.bf16.mxu0 %v1576
        %2009 = vmatpush1.bf16.msra.mxu0 %v1575
        %2010 = vmatprep.subr.bf16.mxu0 %v1572
        %2011 = vmatpush1.bf16.msra.mxu0 %v1571
        %2012 = vmatprep.subr.bf16.mxu0 %v1568
        %2013 = vmatpush1.bf16.msra.mxu0 %v1567
        %2014 = vmatprep.subr.bf16.mxu0 %v1564
        %2015 = vmatpush1.bf16.msra.mxu0 %v1563
        %2016 = vmatprep.subr.bf16.mxu0 %v1560
        %2017 = vmatpush1.bf16.msra.mxu0 %v1559
        %2018 = vmatprep.subr.bf16.mxu0 %v1620
        %2019 = vmatpush2.bf16.msra.mxu0 %v1619
        %2020 = vmatprep.subr.bf16.mxu0 %v1616
        %2021 = vmatpush2.bf16.msra.mxu0 %v1615
        %2022 = vmatprep.subr.bf16.mxu0 %v1612
        %2023 = vmatpush2.bf16.msra.mxu0 %v1611
        %2024 = vmatprep.subr.bf16.mxu0 %v1608
        %2025 = vmatpush2.bf16.msra.mxu0 %v1607
        %2026 = vmatprep.subr.bf16.mxu0 %v1604
        %2027 = vmatpush2.bf16.msra.mxu0 %v1603
        %2028 = vmatprep.subr.bf16.mxu0 %v1600
        %2029 = vmatpush2.bf16.msra.mxu0 %v1599
        %2030 = vmatprep.subr.bf16.mxu0 %v1596
        %2031 = vmatpush2.bf16.msra.mxu0 %v1595
        %2032 = vmatprep.subr.bf16.mxu0 %v1592
        %2033 = vmatpush2.bf16.msra.mxu0 %v1591
        %2034 = vmatprep.mubr.bf16.mxu0 %v590
        %2035 = vmatmul.mubr.bf16.gmra.mxu0 %v588
        %v2036 = vpop.f32.mrf.mxu0
        %v2037 = vadd.f32 %v1996, %v2036
        %v2038 = vpop.f32.mrf.mxu0
        %v2039 = vadd.f32 %v1998, %v2038
        %v2040 = vpop.f32.mrf.mxu0
        %v2041 = vpop.f32.mrf.mxu0
        %2042 = vdwg.mxu0
        %2043 = vmatprep.subr.bf16.mxu0 %v1398
        %2044 = vmatpush1.bf16.msra.mxu0 %v1397
        %2045 = vmatprep.subr.bf16.mxu0 %v1394
        %2046 = vmatpush1.bf16.msra.mxu0 %v1393
        %2047 = vmatprep.subr.bf16.mxu0 %v1390
        %2048 = vmatpush1.bf16.msra.mxu0 %v1389
        %2049 = vmatprep.subr.bf16.mxu0 %v1386
        %2050 = vmatpush1.bf16.msra.mxu0 %v1385
        %2051 = vmatprep.subr.bf16.mxu0 %v1382
        %2052 = vmatpush1.bf16.msra.mxu0 %v1381
        %2053 = vmatprep.subr.bf16.mxu0 %v1378
        %2054 = vmatpush1.bf16.msra.mxu0 %v1377
        %2055 = vmatprep.subr.bf16.mxu0 %v1374
        %2056 = vmatpush1.bf16.msra.mxu0 %v1373
        %2057 = vmatprep.subr.bf16.mxu0 %v1370
        %2058 = vmatpush1.bf16.msra.mxu0 %v1369
        %2059 = vmatprep.subr.bf16.mxu0 %v1430
        %2060 = vmatpush2.bf16.msra.mxu0 %v1429
        %2061 = vmatprep.subr.bf16.mxu0 %v1426
        %2062 = vmatpush2.bf16.msra.mxu0 %v1425
        %2063 = vmatprep.subr.bf16.mxu0 %v1422
        %2064 = vmatpush2.bf16.msra.mxu0 %v1421
        %2065 = vmatprep.subr.bf16.mxu0 %v1418
        %2066 = vmatpush2.bf16.msra.mxu0 %v1417
        %2067 = vmatprep.subr.bf16.mxu0 %v1414
        %2068 = vmatpush2.bf16.msra.mxu0 %v1413
        %2069 = vmatprep.subr.bf16.mxu0 %v1410
        %2070 = vmatpush2.bf16.msra.mxu0 %v1409
        %2071 = vmatprep.subr.bf16.mxu0 %v1406
        %2072 = vmatpush2.bf16.msra.mxu0 %v1405
        %2073 = vmatprep.subr.bf16.mxu0 %v1402
        %2074 = vmatpush2.bf16.msra.mxu0 %v1401
        %2075 = vmatprep.mubr.bf16.mxu0 %v579
        %2076 = vmatmul.mubr.bf16.gmra.mxu0 %v565
        %v2077 = vpop.f32.mrf.mxu0
        %v2078 = vadd.f32 %v532, %v2077
        %v2079 = vpop.f32.mrf.mxu0
        %v2080 = vadd.f32 %v536, %v2079
        %v2081 = vpop.f32.mrf.mxu0
        %v2082 = vpop.f32.mrf.mxu0
        %2083 = vdwg.mxu0
        %2084 = vmatprep.subr.bf16.mxu0 %v1462
        %2085 = vmatpush1.bf16.msra.mxu0 %v1461
        %2086 = vmatprep.subr.bf16.mxu0 %v1458
        %2087 = vmatpush1.bf16.msra.mxu0 %v1457
        %2088 = vmatprep.subr.bf16.mxu0 %v1454
        %2089 = vmatpush1.bf16.msra.mxu0 %v1453
        %2090 = vmatprep.subr.bf16.mxu0 %v1450
        %2091 = vmatpush1.bf16.msra.mxu0 %v1449
        %2092 = vmatprep.subr.bf16.mxu0 %v1446
        %2093 = vmatpush1.bf16.msra.mxu0 %v1445
        %2094 = vmatprep.subr.bf16.mxu0 %v1442
        %2095 = vmatpush1.bf16.msra.mxu0 %v1441
        %2096 = vmatprep.subr.bf16.mxu0 %v1438
        %2097 = vmatpush1.bf16.msra.mxu0 %v1437
        %2098 = vmatprep.subr.bf16.mxu0 %v1434
        %2099 = vmatpush1.bf16.msra.mxu0 %v1433
        %2100 = vmatprep.subr.bf16.mxu0 %v1494
        %2101 = vmatpush2.bf16.msra.mxu0 %v1493
        %2102 = vmatprep.subr.bf16.mxu0 %v1490
        %2103 = vmatpush2.bf16.msra.mxu0 %v1489
        %2104 = vmatprep.subr.bf16.mxu0 %v1486
        %2105 = vmatpush2.bf16.msra.mxu0 %v1485
        %2106 = vmatprep.subr.bf16.mxu0 %v1482
        %2107 = vmatpush2.bf16.msra.mxu0 %v1481
        %2108 = vmatprep.subr.bf16.mxu0 %v1478
        %2109 = vmatpush2.bf16.msra.mxu0 %v1477
        %2110 = vmatprep.subr.bf16.mxu0 %v1474
        %2111 = vmatpush2.bf16.msra.mxu0 %v1473
        %2112 = vmatprep.subr.bf16.mxu0 %v1470
        %2113 = vmatpush2.bf16.msra.mxu0 %v1469
        %2114 = vmatprep.subr.bf16.mxu0 %v1466
        %2115 = vmatpush2.bf16.msra.mxu0 %v1465
        %2116 = vmatprep.mubr.bf16.mxu0 %v589
        %2117 = vmatmul.mubr.bf16.gmra.mxu0 %v587
        %v2118 = vpop.f32.mrf.mxu0
        %v2119 = vadd.f32 %v2078, %v2118
        %v2120 = vpop.f32.mrf.mxu0
        %v2121 = vadd.f32 %v2080, %v2120
        %v2122 = vpop.f32.mrf.mxu0
        %v2123 = vpop.f32.mrf.mxu0
        %2124 = vdwg.mxu0
        %2125 = vmatprep.subr.bf16.mxu0 %v1526
        %2126 = vmatpush1.bf16.msra.mxu0 %v1525
        %2127 = vmatprep.subr.bf16.mxu0 %v1522
        %2128 = vmatpush1.bf16.msra.mxu0 %v1521
        %2129 = vmatprep.subr.bf16.mxu0 %v1518
        %2130 = vmatpush1.bf16.msra.mxu0 %v1517
        %2131 = vmatprep.subr.bf16.mxu0 %v1514
        %2132 = vmatpush1.bf16.msra.mxu0 %v1513
        %2133 = vmatprep.subr.bf16.mxu0 %v1510
        %2134 = vmatpush1.bf16.msra.mxu0 %v1509
        %2135 = vmatprep.subr.bf16.mxu0 %v1506
        %2136 = vmatpush1.bf16.msra.mxu0 %v1505
        %2137 = vmatprep.subr.bf16.mxu0 %v1502
        %2138 = vmatpush1.bf16.msra.mxu0 %v1501
        %2139 = vmatprep.subr.bf16.mxu0 %v1498
        %2140 = vmatpush1.bf16.msra.mxu0 %v1497
        %2141 = vmatprep.subr.bf16.mxu0 %v1558
        %2142 = vmatpush2.bf16.msra.mxu0 %v1557
        %2143 = vmatprep.subr.bf16.mxu0 %v1554
        %2144 = vmatpush2.bf16.msra.mxu0 %v1553
        %2145 = vmatprep.subr.bf16.mxu0 %v1550
        %2146 = vmatpush2.bf16.msra.mxu0 %v1549
        %2147 = vmatprep.subr.bf16.mxu0 %v1546
        %2148 = vmatpush2.bf16.msra.mxu0 %v1545
        %2149 = vmatprep.subr.bf16.mxu0 %v1542
        %2150 = vmatpush2.bf16.msra.mxu0 %v1541
        %2151 = vmatprep.subr.bf16.mxu0 %v1538
        %2152 = vmatpush2.bf16.msra.mxu0 %v1537
        %2153 = vmatprep.subr.bf16.mxu0 %v1534
        %2154 = vmatpush2.bf16.msra.mxu0 %v1533
        %2155 = vmatprep.subr.bf16.mxu0 %v1530
        %2156 = vmatpush2.bf16.msra.mxu0 %v1529
        %2157 = vmatprep.mubr.bf16.mxu0 %v586
        %2158 = vmatmul.mubr.bf16.gmra.mxu0 %v572
        %v2159 = vpop.f32.mrf.mxu0
        %v2160 = vadd.f32 %v2119, %v2159
        %v2161 = vpop.f32.mrf.mxu0
        %v2162 = vadd.f32 %v2121, %v2161
        %v2163 = vpop.f32.mrf.mxu0
        %v2164 = vpop.f32.mrf.mxu0
        %2165 = vdwg.mxu0
        %2166 = vmatprep.subr.bf16.mxu0 %v1590
        %2167 = vmatpush1.bf16.msra.mxu0 %v1589
        %2168 = vmatprep.subr.bf16.mxu0 %v1586
        %2169 = vmatpush1.bf16.msra.mxu0 %v1585
        %2170 = vmatprep.subr.bf16.mxu0 %v1582
        %2171 = vmatpush1.bf16.msra.mxu0 %v1581
        %2172 = vmatprep.subr.bf16.mxu0 %v1578
        %2173 = vmatpush1.bf16.msra.mxu0 %v1577
        %2174 = vmatprep.subr.bf16.mxu0 %v1574
        %2175 = vmatpush1.bf16.msra.mxu0 %v1573
        %2176 = vmatprep.subr.bf16.mxu0 %v1570
        %2177 = vmatpush1.bf16.msra.mxu0 %v1569
        %2178 = vmatprep.subr.bf16.mxu0 %v1566
        %2179 = vmatpush1.bf16.msra.mxu0 %v1565
        %2180 = vmatprep.subr.bf16.mxu0 %v1562
        %2181 = vmatpush1.bf16.msra.mxu0 %v1561
        %2182 = vmatprep.subr.bf16.mxu0 %v1622
        %2183 = vmatpush2.bf16.msra.mxu0 %v1621
        %2184 = vmatprep.subr.bf16.mxu0 %v1618
        %2185 = vmatpush2.bf16.msra.mxu0 %v1617
        %2186 = vmatprep.subr.bf16.mxu0 %v1614
        %2187 = vmatpush2.bf16.msra.mxu0 %v1613
        %2188 = vmatprep.subr.bf16.mxu0 %v1610
        %2189 = vmatpush2.bf16.msra.mxu0 %v1609
        %2190 = vmatprep.subr.bf16.mxu0 %v1606
        %2191 = vmatpush2.bf16.msra.mxu0 %v1605
        %2192 = vmatprep.subr.bf16.mxu0 %v1602
        %2193 = vmatpush2.bf16.msra.mxu0 %v1601
        %2194 = vmatprep.subr.bf16.mxu0 %v1598
        %2195 = vmatpush2.bf16.msra.mxu0 %v1597
        %2196 = vmatprep.subr.bf16.mxu0 %v1594
        %2197 = vmatpush2.bf16.msra.mxu0 %v1593
        %2198 = vmatprep.mubr.bf16.mxu0 %v590
        %2199 = vmatmul.mubr.bf16.gmra.mxu0 %v588
        %v2200 = vpop.f32.mrf.mxu0
        %v2201 = vadd.f32 %v2160, %v2200
        %v2202 = vpop.f32.mrf.mxu0
        %v2203 = vadd.f32 %v2162, %v2202
        %v2204 = vpop.f32.mrf.mxu0
        %v2205 = vpop.f32.mrf.mxu0
        %2206 = vdwg.mxu0
        %v2211 = vcombine.low %v2037, %v2039
        %v2212 = vcombine.low %v2201, %v2203
        %v2214 = vunpack.c.l.s4 1983009808
        %v2215 = vunpack.c.0.s8 %v2214
        %v2216 = vlaneseq
        %v2217 = vshrl.u32 %v2216, 7
        %v2218 = vsub.s32 %v2215, %v2217
        %v2219 = vrot.slane %v2211, %v2218
        %v2221 = vunpack.c.l.s4 1983009808
        %v2222 = vunpack.c.0.s8 %v2221
        %v2223 = vlaneseq
        %v2224 = vshrl.u32 %v2223, 7
        %v2225 = vsub.s32 %v2222, %v2224
        %v2226 = vrot.slane %v2212, %v2225
        %v2227 = vcombine.low %v2219, %v2226
        %2229 = vst [vmem:[%s258] sm:$0xff] %v2227
        %s2230 = sand.u32 %s121, 1
        %s2231 = scalar_lea.sflag [#allocation4], %s2230
        %s2232 = sand.u32 %s121, 1
        %s2233 = smul.addr %s2232, 8
        %s2234 = scalar_lea.vmem [#allocation8], %s2233
        // Predicated region
        $region45: #{tpu_custom_call.1} parent=31 // pred_check
          %p2235 = pneg %p131
        $region46: #{tpu_custom_call.1} parent=31 // pred_check_branch
          %2237 = sbr.rel (%p2235) target = $region48
        $region47: #{tpu_custom_call.1} parent=31 // pred_region
          %s2238 = smul.u32 4, %s26
          %s2240 = ssub.s32 128, 128
          %2241 = vsyncadd %s2231, %s2240
          %s2242 = smul.addr %s25, 8
          %s2243 = sadd.s32 %s2238, %s2242
          %s2244 = smul.addr %s2243, 32
          %s2245 = scalar_lea.hbm %s3, %s2244
          %s2247 = sshll.u32 %s2234, 4
          %s2248 = int_to_ptr.vmem [resolvable:$true] %s2247
          %2250 = dma.vmem_to_hbm [thread:$0]  %s2248, 128, %s2245, %s2231
        $region48: #{tpu_custom_call.1} parent=31 // pred_fallthru
          _
      $region32: #{tpu_custom_call.1} parent=5 // pred_fallthru
        _
      %p2251 = scmp.le.s32.totalorder 2, %s16
      // Predicated region
      $region49: #{tpu_custom_call.1} parent=5 // pred_check
        %p2252 = pneg %p2251
      $region50: #{tpu_custom_call.1} parent=5 // pred_check_branch
        %2254 = sbr.rel (%p2252) target = $region52
      $region51: #{tpu_custom_call.1} parent=5 // pred_region
        %s2255 = ssub.s32 %s16, 2
        // Predicated region
        $region53: #{tpu_custom_call.1} parent=51 // pred_check
          %p2256 = pneg %p137
        $region54: #{tpu_custom_call.1} parent=51 // pred_check_branch
          %2258 = sbr.rel (%p2256) target = $region56
        $region55: #{tpu_custom_call.1} parent=51 // pred_region
          %s2259 = sand.u32 %s122, 1
          %s2260 = scalar_lea.sflag [#allocation4], %s2259
          %s2261 = sand.u32 %s122, 1
          %s2262 = smul.addr %s2261, 8
          %s2263 = scalar_lea.vmem [#allocation8], %s2262
          %2264 = dma.done %s2260, 128
        $region56: #{tpu_custom_call.1} parent=51 // pred_fallthru
          _
      $region52: #{tpu_custom_call.1} parent=5 // pred_fallthru
        _
    $region6: #{tpu_custom_call.1} parent=1 // loop_footer
      %s20 = sadd.s32 1, %s16
    $region7: #{tpu_custom_call.1} parent=1 // loop_footer_branch
      %15 = sbr.rel target = $region3
    $region8: #{tpu_custom_call.1} parent=1 // loop_exit
      _
    %2265 = vsyncpa [#allocation3], 1
    %s2266 = scalar_lea.sflag [#allocation3], 1
    %2267 = vsyncpa %s2266, 1
    %2268 = vsyncpa [#allocation6], 1
    %s2269 = scalar_lea.sflag [#allocation6], 1
    %2270 = vsyncpa %s2269, 1
    %2271 = vsyncpa [#allocation4], 1
    %s2272 = scalar_lea.sflag [#allocation4], 1
    %2273 = vsyncpa %s2272, 1

</llo_original>
